<compile_context>
chip_gen: v6e
topology: v6e:2x2x1
jax: 0.10.0
libtpu: 0.0.40
codegen_flags: <defaults>
</compile_context>

<pallas_src>
import jax
import jax.numpy as jnp
from jax import lax
from jax.experimental import pallas as pl
from jax.experimental.pallas import tpu as pltpu


def _vmem_limit_bytes():
    """Generation-aware VMEM budget: ~3/4 of physical capacity, capped.

    ~48 MiB on v7x (64 MiB physical / TC), ~96 MiB on v5e/v6e (128 MiB).
    """
    try:
        cap = int(pltpu.get_tpu_info().vmem_capacity_bytes)
    except Exception:
        cap = 64 * 1024 * 1024  # conservative (v7x-sized) fallback
    return max(32 * 1024 * 1024, min((cap * 3) // 4, 112 * 1024 * 1024))


def _make_kernel(T, T_pad, num_heads, head_dim, tq, compute_dtype, approx_recip):
    inner = num_heads * head_dim

    def kernel(h_ref, wqkv_ref, wo_ref, bo_ref, o_ref, q_s, k_s, v_s, ctx_s):
        # h_ref:    (1, T_pad, E)   padded sequence for this batch element
        # wqkv_ref: (E, 3*inner)    fused [Wq*scale | Wk | Wv], VMEM-resident
        # wo_ref:   (inner, E)      out-proj weight, VMEM-resident
        # bo_ref:   (1, E)          out-proj bias, f32, VMEM-resident
        # o_ref:    (1, tq, E)      output tile
        # q_s/k_s/v_s: (T_pad, inner) lane-dense projection slabs
        # ctx_s:    (tq, inner)     lane-packed per-tile attention context
        qi = pl.program_id(1)

        # ---- Once per batch element: fused QKV projection for the whole
        # ---- (padded) sequence.  Only 3 inner-wide, lane-aligned slices.
        @pl.when(qi == 0)
        def _():
            h = h_ref[0].astype(compute_dtype)                       # (T_pad, E)
            qkv = jnp.dot(h, wqkv_ref[...],
                          preferred_element_type=jnp.float32)        # (T_pad, 3*inner)
            q_s[...] = qkv[:, :inner].astype(compute_dtype)          # scale pre-folded
            k_s[...] = qkv[:, inner:2 * inner].astype(compute_dtype)
            v_s[...] = qkv[:, 2 * inner:].astype(compute_dtype)

        q_start = pl.multiple_of(qi * tq, tq)
        q_tile = q_s[pl.ds(q_start, tq), :]                          # (tq, inner)

        if T_pad != T:
            # Key-padding mask (only materialized when the wrapper padded T).
            kmask = lax.broadcasted_iota(jnp.int32, (tq, T_pad), 1) < T

        # ---- Static head loop: per-head softmax attention, context packed
        # ---- into ctx_s lanes (no per-head out-proj accumulation).
        for hd in range(num_heads):
            lo = hd * head_dim
            qh = q_tile[:, lo:lo + head_dim]                         # (tq, D)
            kh = k_s[:, lo:lo + head_dim]                            # (T_pad, D)
            vh = v_s[:, lo:lo + head_dim]                            # (T_pad, D)
            s = lax.dot_general(qh, kh, (((1,), (1,)), ((), ())),
                                preferred_element_type=jnp.float32)  # (tq, T_pad)
            if T_pad != T:
                s = jnp.where(kmask, s, jnp.float32(-1e30))
            s = s - jnp.max(s, axis=-1, keepdims=True)
            p = jnp.exp(s)
            denom = jnp.sum(p, axis=-1, keepdims=True)
            if approx_recip:
                p = p * pl.reciprocal(denom, approx=True)            # EUP slot
            else:
                p = p / denom                                        # exact (parity)
            oh = jnp.dot(p.astype(compute_dtype), vh,
                         preferred_element_type=jnp.float32)         # (tq, D)
            ctx_s[:, lo:lo + head_dim] = oh.astype(compute_dtype)

        # ---- Single full-depth output projection (K = inner) + bias.
        out = jnp.dot(ctx_s[...], wo_ref[...],
                      preferred_element_type=jnp.float32)            # (tq, E)
        o_ref[0] = (out + bo_ref[...]).astype(o_ref.dtype)

    return kernel


def pack_ldmbert_attention_params(wq, wk, wv, wo, bo, *, head_dim,
                                  compute_dtype=jnp.bfloat16):
    """One-time parameter repack (do this at model load and cache the result).

    Folds the 1/sqrt(head_dim) query scale into Wq, fuses [Wq|Wk|Wv] into a
    single (E, 3*inner) slab, and casts weights to the MXU compute dtype.
    """
    scaling = float(head_dim) ** (-0.5)
    wqkv = jnp.concatenate([wq * scaling, wk, wv], axis=1).astype(compute_dtype)
    wo_c = jnp.asarray(wo, compute_dtype)
    bo2 = jnp.asarray(bo, jnp.float32).reshape(1, -1)
    return wqkv, wo_c, bo2


def ldmbert_attention_packed(hidden_states, wqkv, wo, bo2, *, num_heads, head_dim,
                             tq=None, compute_dtype=jnp.bfloat16,
                             approx_softmax_recip=True, vmem_limit_bytes=None):
    """hidden_states: (B, T, E); wqkv: (E, 3*inner); wo: (inner, E); bo2: (1, E)."""
    B, T, E = hidden_states.shape
    inner = num_heads * head_dim
    assert wqkv.shape == (E, 3 * inner)
    assert wo.shape == (inner, E) and bo2.shape == (1, E)
    # NOTE: keep E a multiple of 128 for lane-dense output stores (real
    # LDMBert E = 1280 satisfies this).  E-padding would require masking the
    # padded Wo/bias columns; not wired up here.

    if vmem_limit_bytes is None:
        vmem_limit_bytes = _vmem_limit_bytes()

    # Pad T to a multiple of 128 so every matmul / reduction / store stays
    # full-tile (LDMBert's T=77 would otherwise waste ~40% of the lanes).
    # Padded key columns are masked in the kernel; padded rows sliced off here.
    T_pad = ((T + 127) // 128) * 128
    if tq is None:
        # 256-row query tiles when VMEM is 128 MiB class (v5e/v6e); 128 on v7x.
        tq = 256 if (vmem_limit_bytes >= 72 * 1024 * 1024 and T_pad % 256 == 0) else 128
    assert T_pad % tq == 0, "padded T must be divisible by the query tile size"
    nqt = T_pad // tq

    out_dtype = hidden_states.dtype
    h_in = hidden_states.astype(compute_dtype)   # halve activation DMA on bf16 path
    if T_pad != T:
        h_in = jnp.pad(h_in, ((0, 0), (0, T_pad - T), (0, 0)))

    kernel = _make_kernel(T, T_pad, num_heads, head_dim, tq, compute_dtype,
                          approx_softmax_recip)

    wbytes = jnp.dtype(compute_dtype).itemsize
    cost = pl.CostEstimate(
        flops=int(2 * B * T_pad * E * 3 * inner                       # QKV proj
                  + 2 * B * num_heads * T_pad * T_pad * head_dim * 2  # scores + PV
                  + 2 * B * T_pad * inner * E),                       # out proj
        transcendentals=int(B * num_heads * T_pad * T_pad),           # exp
        bytes_accessed=int(B * T_pad * E * wbytes                     # hidden in
                           + (E * 3 * inner + inner * E) * wbytes     # weights
                           + E * 4                                    # bias
                           + B * T_pad * E * jnp.dtype(out_dtype).itemsize),
    )

    grid_spec = pltpu.PrefetchScalarGridSpec(
        num_scalar_prefetch=0,
        grid=(B, nqt),
        in_specs=[
            # Per-batch hidden slab (pipelined / double-buffered).
            pl.BlockSpec((1, T_pad, E), lambda b, qi: (b, 0, 0)),
            # Constant weights: whole-array VMEM residency (fetched once,
            # single-buffered -- no per-step re-DMA, no double-buffer waste).
            pl.BlockSpec(memory_space=pltpu.MemorySpace.VMEM),   # fused Wqkv
            pl.BlockSpec(memory_space=pltpu.MemorySpace.VMEM),   # Wo
            pl.BlockSpec(memory_space=pltpu.MemorySpace.VMEM),   # out bias
        ],
        out_specs=pl.BlockSpec((1, tq, E), lambda b, qi: (b, qi, 0)),
        scratch_shapes=[
            pltpu.VMEM((T_pad, inner), compute_dtype),   # q slab (scale folded in)
            pltpu.VMEM((T_pad, inner), compute_dtype),   # k slab
            pltpu.VMEM((T_pad, inner), compute_dtype),   # v slab
            pltpu.VMEM((tq, inner), compute_dtype),      # lane-packed context tile
        ],
    )

    out = pl.pallas_call(
        kernel,
        out_shape=jax.ShapeDtypeStruct((B, T_pad, E), out_dtype),
        grid_spec=grid_spec,
        compiler_params=pltpu.CompilerParams(
            dimension_semantics=("parallel", "arbitrary"),
            vmem_limit_bytes=int(vmem_limit_bytes),
        ),
        cost_estimate=cost,
    )(h_in, wqkv, wo, bo2)

    if T_pad != T:
        out = out[:, :T, :]
    return out


def ldmbert_attention(hidden_states, wq, wk, wv, wo, bo, *, num_heads, head_dim,
                      tq=None, compute_dtype=jnp.bfloat16,
                      approx_softmax_recip=True):
    """Convenience wrapper: packs weights then calls the kernel.  For real use,
    call pack_ldmbert_attention_params once at load and reuse the packed tuple."""
    packed = pack_ldmbert_attention_params(wq, wk, wv, wo, bo, head_dim=head_dim,
                                           compute_dtype=compute_dtype)
    return ldmbert_attention_packed(hidden_states, *packed,
                                    num_heads=num_heads, head_dim=head_dim, tq=tq,
                                    compute_dtype=compute_dtype,
                                    approx_softmax_recip=approx_softmax_recip)


def reference_attention(h, wq, wk, wv, wo, bo, *, num_heads, head_dim):
    """Plain-JAX f32 reference matching the PyTorch forward semantics."""
    B, T, E = h.shape
    scaling = float(head_dim) ** (-0.5)
    q = (h @ wq) * scaling
    k = h @ wk
    v = h @ wv

    def split(x):  # (B,T,inner) -> (B,H,T,D)
        return x.reshape(B, T, num_heads, head_dim).transpose(0, 2, 1, 3)

    q, k, v = split(q), split(k), split(v)
    scores = jnp.einsum("bhtd,bhsd->bhts", q, k)
    probs = jax.nn.softmax(scores, axis=-1)
    out = jnp.einsum("bhts,bhsd->bhtd", probs, v)
    out = out.transpose(0, 2, 1, 3).reshape(B, T, num_heads * head_dim)
    return out @ wo + bo


if __name__ == "__main__":
    # Small shapes consistent with the module; T = 77 is LDMBert's real text
    # length and exercises the pad-to-128 + key-mask path.
    B, T, E = 2, 77, 128
    num_heads, head_dim = 2, 64
    inner = num_heads * head_dim

    key = jax.random.PRNGKey(0)
    kh, kq, kk, kv, ko, kb = jax.random.split(key, 6)

    hidden_states = jax.random.normal(kh, (B, T, E), dtype=jnp.float32)
    # nn.Linear-equivalent params stored transposed so the kernel uses x @ W.
    wq = jax.random.normal(kq, (E, inner), dtype=jnp.float32) * 0.05
    wk = jax.random.normal(kk, (E, inner), dtype=jnp.float32) * 0.05
    wv = jax.random.normal(kv, (E, inner), dtype=jnp.float32) * 0.05
    wo = jax.random.normal(ko, (inner, E), dtype=jnp.float32) * 0.05
    bo = jax.random.normal(kb, (E,), dtype=jnp.float32) * 0.05

    ref = reference_attention(hidden_states, wq, wk, wv, wo, bo,
                              num_heads=num_heads, head_dim=head_dim)

    # ---- f32 compute path, exact softmax: tight structural / padding check.
    packed_f32 = pack_ldmbert_attention_params(wq, wk, wv, wo, bo,
                                               head_dim=head_dim,
                                               compute_dtype=jnp.float32)
    out_f32 = ldmbert_attention_packed(hidden_states, *packed_f32,
                                       num_heads=num_heads, head_dim=head_dim,
                                       compute_dtype=jnp.float32,
                                       approx_softmax_recip=False)
    out_f32 = jax.block_until_ready(out_f32)
    assert out_f32.shape == (B, T, E)
    assert jnp.allclose(out_f32, ref, atol=1e-3, rtol=1e-3), "f32 path mismatch"

    # ---- bf16 MXU fast path (weights packed once, reused): loose tolerance.
    packed_bf16 = pack_ldmbert_attention_params(wq, wk, wv, wo, bo,
                                                head_dim=head_dim,
                                                compute_dtype=jnp.bfloat16)
    out_bf16 = ldmbert_attention_packed(hidden_states, *packed_bf16,
                                        num_heads=num_heads, head_dim=head_dim,
                                        compute_dtype=jnp.bfloat16)
    out_bf16 = jax.block_until_ready(out_bf16)
    assert out_bf16.shape == (B, T, E)
    assert jnp.allclose(out_bf16, ref, atol=2e-2, rtol=2e-2), "bf16 path mismatch"

    # ---- No-padding path (T already a multiple of 128, possibly multi-tile).
    T2 = 256
    h2 = jax.random.normal(kh, (1, T2, E), dtype=jnp.float32)
    ref2 = reference_attention(h2, wq, wk, wv, wo, bo,
                               num_heads=num_heads, head_dim=head_dim)
    out2 = ldmbert_attention_packed(h2, *packed_bf16,
                                    num_heads=num_heads, head_dim=head_dim,
                                    compute_dtype=jnp.bfloat16)
    out2 = jax.block_until_ready(out2)
    assert out2.shape == (1, T2, E)
    assert jnp.allclose(out2, ref2, atol=2e-2, rtol=2e-2), "no-pad path mismatch"

    print("KERNEL_OK")
</pallas_src>

<mosaic_0001>
module attributes {stable_mosaic.version = 11 : i64} {
  func.func @kernel(%arg0: i32, %arg1: i32, %arg2: memref<1x128x128xf32, #tpu.memory_space<vmem>>, %arg3: memref<128x384xf32, #tpu.memory_space<vmem>>, %arg4: memref<128x128xf32, #tpu.memory_space<vmem>>, %arg5: memref<1x128xf32, #tpu.memory_space<vmem>>, %arg6: memref<1x128x128xf32, #tpu.memory_space<vmem>>, %arg7: memref<128x128xf32, #tpu.memory_space<vmem>>, %arg8: memref<128x128xf32, #tpu.memory_space<vmem>>, %arg9: memref<128x128xf32, #tpu.memory_space<vmem>>, %arg10: memref<128x128xf32, #tpu.memory_space<vmem>>) attributes {dimension_semantics = [#tpu.dimension_semantics<parallel>, #tpu.dimension_semantics<arbitrary>], iteration_bounds = array<i64: 2, 1>, scalar_prefetch = 0 : i64, scratch_operands = 4 : i64, tpu.core_type = #tpu.core_type<tc>, window_params = [{transform_indices = @transform_0, window_bounds = array<i64: 1, 128, 128>}, {pipeline_mode = #tpu.pipeline_mode<synchronous>, transform_indices = @transform_1, window_bounds = array<i64: 128, 384>}, {pipeline_mode = #tpu.pipeline_mode<synchronous>, transform_indices = @transform_2, window_bounds = array<i64: 128, 128>}, {pipeline_mode = #tpu.pipeline_mode<synchronous>, transform_indices = @transform_3, window_bounds = array<i64: 1, 128>}, {transform_indices = @transform_4, window_bounds = array<i64: 1, 128, 128>}]} {
    %c0_i32 = arith.constant 0 : i32
    %0 = arith.cmpi eq, %arg1, %c0_i32 : i32
    %1 = arith.extui %0 : i1 to i32
    %c0_i32_0 = arith.constant 0 : i32
    %2 = arith.cmpi ne, %1, %c0_i32_0 : i32
    scf.if %2 {
      %c0_31 = arith.constant 0 : index
      %c0_32 = arith.constant 0 : index
      %c0_33 = arith.constant 0 : index
      %53 = vector.load %arg2[%c0_31, %c0_32, %c0_33] : memref<1x128x128xf32, #tpu.memory_space<vmem>>, vector<1x128x128xf32>
      %54 = vector.shape_cast %53 : vector<1x128x128xf32> to vector<128x128xf32>
      %c0_34 = arith.constant 0 : index
      %c0_35 = arith.constant 0 : index
      %55 = vector.load %arg3[%c0_34, %c0_35] : memref<128x384xf32, #tpu.memory_space<vmem>>, vector<128x384xf32>
      %cst_36 = arith.constant dense<0.000000e+00> : vector<128x384xf32>
      %56 = tpu.matmul %54, %55, %cst_36 {dimension_numbers = #tpu.dot_dimension_numbers<[1], [0], [0], [1], [0, 0, 1, 1], [], []>} : vector<128x128xf32>, vector<128x384xf32>, vector<128x384xf32> -> vector<128x384xf32>
      %57 = vector.extract_strided_slice %56 {offsets = [0, 0], sizes = [128, 128], strides = [1, 1]} : vector<128x384xf32> to vector<128x128xf32>
      %c0_37 = arith.constant 0 : index
      %c0_38 = arith.constant 0 : index
      %58 = vector.load %arg7[%c0_37, %c0_38] : memref<128x128xf32, #tpu.memory_space<vmem>>, vector<128x128xf32>
      tpu.vector_store %arg7[%c0_37, %c0_38], %57 {strides = array<i32>} : memref<128x128xf32, #tpu.memory_space<vmem>>, vector<128x128xf32>,
      %59 = vector.extract_strided_slice %56 {offsets = [0, 128], sizes = [128, 128], strides = [1, 1]} : vector<128x384xf32> to vector<128x128xf32>
      %c0_39 = arith.constant 0 : index
      %c0_40 = arith.constant 0 : index
      %60 = vector.load %arg8[%c0_39, %c0_40] : memref<128x128xf32, #tpu.memory_space<vmem>>, vector<128x128xf32>
      tpu.vector_store %arg8[%c0_39, %c0_40], %59 {strides = array<i32>} : memref<128x128xf32, #tpu.memory_space<vmem>>, vector<128x128xf32>,
      %61 = vector.extract_strided_slice %56 {offsets = [0, 256], sizes = [128, 128], strides = [1, 1]} : vector<128x384xf32> to vector<128x128xf32>
      %c0_41 = arith.constant 0 : index
      %c0_42 = arith.constant 0 : index
      %62 = vector.load %arg9[%c0_41, %c0_42] : memref<128x128xf32, #tpu.memory_space<vmem>>, vector<128x128xf32>
      tpu.vector_store %arg9[%c0_41, %c0_42], %61 {strides = array<i32>} : memref<128x128xf32, #tpu.memory_space<vmem>>, vector<128x128xf32>,
    } else {
    }
    %c128_i32 = arith.constant 128 : i32
    %3 = arith.muli %arg1, %c128_i32 : i32
    %4 = tpu.assume_multiple %3, 128 : i32
    %5 = arith.index_cast %4 : i32 to index
    %c0 = arith.constant 0 : index
    %6 = vector.load %arg7[%5, %c0] : memref<128x128xf32, #tpu.memory_space<vmem>>, vector<128x128xf32>
    %7 = tpu.iota {dimensions = array<i32: 1>} : vector<128x128xi32>
    %c77_i32 = arith.constant 77 : i32
    %8 = vector.broadcast %c77_i32 : i32 to vector<128x128xi32>
    %9 = arith.cmpi slt, %7, %8 : vector<128x128xi32>
    %10 = vector.extract_strided_slice %6 {offsets = [0, 0], sizes = [128, 64], strides = [1, 1]} : vector<128x128xf32> to vector<128x64xf32>
    %c0_1 = arith.constant 0 : index
    %c0_2 = arith.constant 0 : index
    %11 = vector.load %arg8[%c0_1, %c0_2] : memref<128x128xf32, #tpu.memory_space<vmem>>, vector<128x64xf32>
    %c0_3 = arith.constant 0 : index
    %c0_4 = arith.constant 0 : index
    %12 = vector.load %arg9[%c0_3, %c0_4] : memref<128x128xf32, #tpu.memory_space<vmem>>, vector<128x64xf32>
    %cst = arith.constant dense<0.000000e+00> : vector<128x128xf32>
    %13 = tpu.matmul %10, %11, %cst {dimension_numbers = #tpu.dot_dimension_numbers<[1], [1], [0], [0], [0, 0, 1, 0], [], []>} : vector<128x64xf32>, vector<128x64xf32>, vector<128x128xf32> -> vector<128x128xf32>
    %cst_5 = arith.constant -1.000000e+30 : f32
    %14 = vector.broadcast %cst_5 : f32 to vector<128x128xf32>
    %15 = arith.select %9, %13, %14 : vector<128x128xi1>, vector<128x128xf32>
    %cst_6 = arith.constant dense<0xFF800000> : vector<128xf32>
    %16 = vector.multi_reduction <maximumf>, %15, %cst_6 [1] : vector<128x128xf32> to vector<128xf32>
    %17 = vector.shape_cast %16 : vector<128xf32> to vector<128x1xf32>
    %18 = vector.broadcast %17 : vector<128x1xf32> to vector<128x128xf32>
    %19 = arith.subf %15, %18 : vector<128x128xf32>
    %20 = math.exp %19 : vector<128x128xf32>
    %cst_7 = arith.constant dense<0.000000e+00> : vector<128xf32>
    %21 = vector.multi_reduction <add>, %20, %cst_7 [1] : vector<128x128xf32> to vector<128xf32>
    %22 = vector.shape_cast %21 : vector<128xf32> to vector<128x1xf32>
    %23 = vector.broadcast %22 : vector<128x1xf32> to vector<128x128xf32>
    %24 = arith.divf %20, %23 : vector<128x128xf32>
    %cst_8 = arith.constant dense<0.000000e+00> : vector<128x64xf32>
    %25 = tpu.matmul %24, %12, %cst_8 {dimension_numbers = #tpu.dot_dimension_numbers<[1], [0], [0], [1], [0, 0, 1, 1], [], []>} : vector<128x128xf32>, vector<128x64xf32>, vector<128x64xf32> -> vector<128x64xf32>
    %c0_9 = arith.constant 0 : index
    %c0_10 = arith.constant 0 : index
    %26 = vector.load %arg10[%c0_9, %c0_10] : memref<128x128xf32, #tpu.memory_space<vmem>>, vector<128x64xf32>
    tpu.vector_store %arg10[%c0_9, %c0_10], %25 {strides = array<i32>} : memref<128x128xf32, #tpu.memory_space<vmem>>, vector<128x64xf32>,
    %27 = vector.extract_strided_slice %6 {offsets = [0, 64], sizes = [128, 64], strides = [1, 1]} : vector<128x128xf32> to vector<128x64xf32>
    %c0_11 = arith.constant 0 : index
    %c64 = arith.constant 64 : index
    %28 = vector.load %arg8[%c0_11, %c64] : memref<128x128xf32, #tpu.memory_space<vmem>>, vector<128x64xf32>
    %c0_12 = arith.constant 0 : index
    %c64_13 = arith.constant 64 : index
    %29 = vector.load %arg9[%c0_12, %c64_13] : memref<128x128xf32, #tpu.memory_space<vmem>>, vector<128x64xf32>
    %cst_14 = arith.constant dense<0.000000e+00> : vector<128x128xf32>
    %30 = tpu.matmul %27, %28, %cst_14 {dimension_numbers = #tpu.dot_dimension_numbers<[1], [1], [0], [0], [0, 0, 1, 0], [], []>} : vector<128x64xf32>, vector<128x64xf32>, vector<128x128xf32> -> vector<128x128xf32>
    %cst_15 = arith.constant -1.000000e+30 : f32
    %31 = vector.broadcast %cst_15 : f32 to vector<128x128xf32>
    %32 = arith.select %9, %30, %31 : vector<128x128xi1>, vector<128x128xf32>
    %cst_16 = arith.constant dense<0xFF800000> : vector<128xf32>
    %33 = vector.multi_reduction <maximumf>, %32, %cst_16 [1] : vector<128x128xf32> to vector<128xf32>
    %34 = vector.shape_cast %33 : vector<128xf32> to vector<128x1xf32>
    %35 = vector.broadcast %34 : vector<128x1xf32> to vector<128x128xf32>
    %36 = arith.subf %32, %35 : vector<128x128xf32>
    %37 = math.exp %36 : vector<128x128xf32>
    %cst_17 = arith.constant dense<0.000000e+00> : vector<128xf32>
    %38 = vector.multi_reduction <add>, %37, %cst_17 [1] : vector<128x128xf32> to vector<128xf32>
    %39 = vector.shape_cast %38 : vector<128xf32> to vector<128x1xf32>
    %40 = vector.broadcast %39 : vector<128x1xf32> to vector<128x128xf32>
    %41 = arith.divf %37, %40 : vector<128x128xf32>
    %cst_18 = arith.constant dense<0.000000e+00> : vector<128x64xf32>
    %42 = tpu.matmul %41, %29, %cst_18 {dimension_numbers = #tpu.dot_dimension_numbers<[1], [0], [0], [1], [0, 0, 1, 1], [], []>} : vector<128x128xf32>, vector<128x64xf32>, vector<128x64xf32> -> vector<128x64xf32>
    %c0_19 = arith.constant 0 : index
    %c64_20 = arith.constant 64 : index
    %43 = vector.load %arg10[%c0_19, %c64_20] : memref<128x128xf32, #tpu.memory_space<vmem>>, vector<128x64xf32>
    tpu.vector_store %arg10[%c0_19, %c64_20], %42 {strides = array<i32>} : memref<128x128xf32, #tpu.memory_space<vmem>>, vector<128x64xf32>,
    %c0_21 = arith.constant 0 : index
    %c0_22 = arith.constant 0 : index
    %44 = vector.load %arg10[%c0_21, %c0_22] : memref<128x128xf32, #tpu.memory_space<vmem>>, vector<128x128xf32>
    %c0_23 = arith.constant 0 : index
    %c0_24 = arith.constant 0 : index
    %45 = vector.load %arg4[%c0_23, %c0_24] : memref<128x128xf32, #tpu.memory_space<vmem>>, vector<128x128xf32>
    %cst_25 = arith.constant dense<0.000000e+00> : vector<128x128xf32>
    %46 = tpu.matmul %44, %45, %cst_25 {dimension_numbers = #tpu.dot_dimension_numbers<[1], [0], [0], [1], [0, 0, 1, 1], [], []>} : vector<128x128xf32>, vector<128x128xf32>, vector<128x128xf32> -> vector<128x128xf32>
    %c0_26 = arith.constant 0 : index
    %c0_27 = arith.constant 0 : index
    %47 = vector.load %arg5[%c0_26, %c0_27] : memref<1x128xf32, #tpu.memory_space<vmem>>, vector<1x128xf32>
    %48 = vector.broadcast %47 : vector<1x128xf32> to vector<128x128xf32>
    %49 = arith.addf %46, %48 : vector<128x128xf32>
    %c0_28 = arith.constant 0 : index
    %c0_29 = arith.constant 0 : index
    %c0_30 = arith.constant 0 : index
    %50 = vector.load %arg6[%c0_28, %c0_29, %c0_30] : memref<1x128x128xf32, #tpu.memory_space<vmem>>, vector<1x128x128xf32>
    %51 = vector.shape_cast %50 : vector<1x128x128xf32> to vector<128x128xf32>
    %52 = vector.shape_cast %49 : vector<128x128xf32> to vector<1x128x128xf32>
    tpu.vector_store %arg6[%c0_28, %c0_29, %c0_30], %52 {strides = array<i32>} : memref<1x128x128xf32, #tpu.memory_space<vmem>>, vector<1x128x128xf32>,
    return
  }
  func.func @transform_0(%arg0: i32, %arg1: i32) -> (i32, i32, i32) {
    %c0_i32 = arith.constant 0 : i32
    %c0_i32_0 = arith.constant 0 : i32
    %c0_i32_1 = arith.constant 0 : i32
    return %arg0, %c0_i32, %c0_i32_0 : i32, i32, i32
  }
  func.func @transform_1(%arg0: i32, %arg1: i32) -> (i32, i32) {
    %c0_i32 = arith.constant 0 : i32
    %c0_i32_0 = arith.constant 0 : i32
    %c0_i32_1 = arith.constant 0 : i32
    return %c0_i32, %c0_i32_0 : i32, i32
  }
  func.func @transform_2(%arg0: i32, %arg1: i32) -> (i32, i32) {
    %c0_i32 = arith.constant 0 : i32
    %c0_i32_0 = arith.constant 0 : i32
    %c0_i32_1 = arith.constant 0 : i32
    return %c0_i32, %c0_i32_0 : i32, i32
  }
  func.func @transform_3(%arg0: i32, %arg1: i32) -> (i32, i32) {
    %c0_i32 = arith.constant 0 : i32
    %c0_i32_0 = arith.constant 0 : i32
    %c0_i32_1 = arith.constant 0 : i32
    return %c0_i32, %c0_i32_0 : i32, i32
  }
  func.func @transform_4(%arg0: i32, %arg1: i32) -> (i32, i32, i32) {
    %c0_i32 = arith.constant 0 : i32
    %c0_i32_0 = arith.constant 0 : i32
    return %arg0, %arg1, %c0_i32 : i32, i32, i32
  }
}

</mosaic_0001>

<llo_original>
// kernel: tpu_custom_call.1
$region0: #{tpu_custom_call.1}
  #allocation0 [shape = 'u32[]', space=smem, size = 0x4, offset = 0x4, fixed_abs, tag = 'smem constant byte address 0x4 - core index']
  #allocation1 [shape = 'u32[144,128]{1,0:T(1,128)}', space=vmem, size = 0x12000, scoped, tag = 'internal scratch']
  #allocation2 [shape = 'f32[128,128]{1,0:T(8,128)}', space=vmem, size = 0x10000, scoped, tag = 'scratch operand']
  #allocation3 [shape = 'f32[128,128]{1,0:T(8,128)}', space=vmem, size = 0x10000, scoped, tag = 'scratch operand']
  #allocation4 [shape = 'f32[128,128]{1,0:T(8,128)}', space=vmem, size = 0x10000, scoped, tag = 'scratch operand']
  #allocation5 [shape = 'f32[128,128]{1,0:T(8,128)}', space=vmem, size = 0x10000, scoped, tag = 'scratch operand']
  %s0 = inlined_call_operand.hbm [shape: f32[2,128,128], index: 0, kind: input, shape index: {}]
  %s1 = inlined_call_operand.hbm [shape: f32[128,384], index: 1, kind: input, shape index: {}]
  %s2 = inlined_call_operand.hbm [shape: f32[128,128], index: 2, kind: input, shape index: {}]
  %s3 = inlined_call_operand.vmem [shape: f32[1,128], index: 3, kind: input, shape index: {}]
  %s4 = inlined_call_operand.hbm [shape: f32[2,128,128], index: 4, kind: output, shape index: {}]
  %s5 = sld [smem:[#allocation0]]
  $region65: #{tpu_custom_call.1} parent=0
    _
  %s7 = ssub.s32 1, %s5
  %s8 = scalar_select 0, %s7, %s5
  $region1: #{tpu_custom_call.1} parent=0
    #allocation6 [shape = 'u8[131072]{0}', space=vmem, size = 0x20000, scoped, tag = 'input window, operand 0']
    #allocation7 [shape = 's32[2]{0}', space=sflag, size = 0x8, scoped, tag = 'scoped memory for tpu_custom_call.1']
    #allocation8 [shape = 's32[2]{0}', space=sflag, size = 0x8, scoped, tag = 'scoped memory for tpu_custom_call.1']
    #allocation9 [shape = 'u8[196608]{0}', space=vmem, size = 0x30000, scoped, tag = 'input window, operand 1, single buffered']
    #allocation10 [shape = 's32[1]{0}', space=sflag, size = 0x4, scoped, tag = 'scoped memory for tpu_custom_call.1']
    #allocation11 [shape = 'u8[65536]{0}', space=vmem, size = 0x10000, scoped, tag = 'input window, operand 2, single buffered']
    #allocation12 [shape = 'u8[131072]{0}', space=vmem, size = 0x20000, scoped, tag = 'output window, operand 0']
    %9 = vsyncpa [#allocation7], 0
    %s10 = scalar_lea.sflag [#allocation7], 1
    %11 = vsyncpa %s10, 0
    %12 = vsyncpa [#allocation10], 0
    %13 = vsyncpa [#allocation8], 0
    %s14 = scalar_lea.sflag [#allocation8], 1
    %15 = vsyncpa %s14, 0
    loop: start=0, step=1, limit=4
    $region2: #{tpu_custom_call.1} parent=1 // loop_pre_header
      _
    $region3: #{tpu_custom_call.1} parent=1 // loop_header
      %s17 = sphi 0, %s21
      %p18 = scmp.ge.s32.totalorder %s17, 4
      %s24 = sphi 0, %s36
      %s25 = sphi 0, %s32
      %s26 = sphi 0, %s24
      %s27 = sphi 0, %s25
      %s28 = sphi 0, %s26
      %s29 = sphi 0, %s27
      %s39 = sphi 0, %s41
      %s42 = sphi 0, %s39
      %s43 = sphi 0, %s42
      %s59 = sphi 0, %s43
      %s63 = sphi 0, %s63
      %s65 = sphi 0, %s63
      %s66 = sphi 0, %s65
      %s80 = sphi 0, %s66
      %s84 = sphi 0, %s84
      %s86 = sphi 0, %s84
      %s87 = sphi 0, %s86
      %s101 = sphi 0, %s87
      %s105 = sphi 0, %s105
      %s107 = sphi 0, %s105
      %s108 = sphi 0, %s107
      %s122 = sphi 0, %s108
      %s130 = sphi 0, %s132
      %s133 = sphi 0, %s130
      %s134 = sphi 0, %s133
      %s150 = sphi 0, %s134
    $region4: #{tpu_custom_call.1} parent=1 // loop_header_branch
      %20 = sbr.rel (%p18) target = $region8
    $region5: #{tpu_custom_call.1} parent=1 // loop_body
      %s22 = ssub.s32 %s17, 1
      %s23 = ssub.s32 %s17, 2
      %s30 = sadd.s32 1, %s25
      %p31 = scmp.ge.s32.totalorder %s30, 1
      %s32 = scalar_select %p31, 0, %s30
      %s33 = sadd.s32 1, %s24
      %s34 = scalar_select %p31, %s33, %s24
      %p35 = scmp.ge.s32.totalorder %s34, 2
      %s36 = scalar_select %p35, 0, %s34
      %s37 = ssub.s32 %s24, %s36
      %p38 = scmp.eq.s32.totalorder %s37, 0
      %s40 = sadd.s32 %s39, 1
      %s41 = scalar_select %p38, %s39, %s40
      %p44 = pneg %p38
      %p45 = scmp.eq.s32.totalorder %s17, 1
      %p46 = por %p44, %p45
      %p47 = scmp.ne.s32.totalorder %s39, %s42
      %p48 = scmp.eq.s32.totalorder %s17, 0
      %p49 = por %p47, %p48
      %p50 = scmp.ne.s32.totalorder %s39, %s42
      %p51 = scmp.eq.s32.totalorder %s22, 1
      %p52 = por %p50, %p51
      %p53 = scmp.ne.s32.totalorder %s42, %s43
      %p54 = scmp.eq.s32.totalorder %s22, 0
      %p55 = por %p53, %p54
      %p56 = scmp.ne.s32.totalorder %s42, %s43
      %p57 = scmp.eq.s32.totalorder %s23, 1
      %p58 = por %p56, %p57
      %p60 = scmp.ne.s32.totalorder %s43, %s59
      %p61 = scmp.eq.s32.totalorder %s23, 0
      %p62 = por %p60, %p61
      %s64 = sadd.s32 %s63, 1
      %p67 = scmp.eq.s32.totalorder %s17, 1
      %p68 = scmp.ne.s32.totalorder %s63, %s65
      %p69 = scmp.eq.s32.totalorder %s17, 0
      %p70 = por %p68, %p69
      %p71 = scmp.ne.s32.totalorder %s63, %s65
      %p72 = scmp.eq.s32.totalorder %s22, 1
      %p73 = por %p71, %p72
      %p74 = scmp.ne.s32.totalorder %s65, %s66
      %p75 = scmp.eq.s32.totalorder %s22, 0
      %p76 = por %p74, %p75
      %p77 = scmp.ne.s32.totalorder %s65, %s66
      %p78 = scmp.eq.s32.totalorder %s23, 1
      %p79 = por %p77, %p78
      %p81 = scmp.ne.s32.totalorder %s66, %s80
      %p82 = scmp.eq.s32.totalorder %s23, 0
      %p83 = por %p81, %p82
      %s85 = sadd.s32 %s84, 1
      %p88 = scmp.eq.s32.totalorder %s17, 1
      %p89 = scmp.ne.s32.totalorder %s84, %s86
      %p90 = scmp.eq.s32.totalorder %s17, 0
      %p91 = por %p89, %p90
      %p92 = scmp.ne.s32.totalorder %s84, %s86
      %p93 = scmp.eq.s32.totalorder %s22, 1
      %p94 = por %p92, %p93
      %p95 = scmp.ne.s32.totalorder %s86, %s87
      %p96 = scmp.eq.s32.totalorder %s22, 0
      %p97 = por %p95, %p96
      %p98 = scmp.ne.s32.totalorder %s86, %s87
      %p99 = scmp.eq.s32.totalorder %s23, 1
      %p100 = por %p98, %p99
      %p102 = scmp.ne.s32.totalorder %s87, %s101
      %p103 = scmp.eq.s32.totalorder %s23, 0
      %p104 = por %p102, %p103
      %s106 = sadd.s32 %s105, 1
      %p109 = scmp.eq.s32.totalorder %s17, 1
      %p110 = scmp.ne.s32.totalorder %s105, %s107
      %p111 = scmp.eq.s32.totalorder %s17, 0
      %p112 = por %p110, %p111
      %p113 = scmp.ne.s32.totalorder %s105, %s107
      %p114 = scmp.eq.s32.totalorder %s22, 1
      %p115 = por %p113, %p114
      %p116 = scmp.ne.s32.totalorder %s107, %s108
      %p117 = scmp.eq.s32.totalorder %s22, 0
      %p118 = por %p116, %p117
      %p119 = scmp.ne.s32.totalorder %s107, %s108
      %p120 = scmp.eq.s32.totalorder %s23, 1
      %p121 = por %p119, %p120
      %p123 = scmp.ne.s32.totalorder %s108, %s122
      %p124 = scmp.eq.s32.totalorder %s23, 0
      %p125 = por %p123, %p124
      %s126 = ssub.s32 %s24, %s36
      %s127 = ssub.s32 %s25, %s32
      %s128 = sor.u32 %s126, %s127
      %p129 = scmp.eq.s32.totalorder %s128, 0
      %s131 = sadd.s32 %s130, 1
      %s132 = scalar_select %p129, %s130, %s131
      %p135 = pneg %p129
      %p136 = scmp.eq.s32.totalorder %s17, 1
      %p137 = por %p135, %p136
      %p138 = scmp.ne.s32.totalorder %s130, %s133
      %p139 = scmp.eq.s32.totalorder %s17, 0
      %p140 = por %p138, %p139
      %p141 = scmp.ne.s32.totalorder %s130, %s133
      %p142 = scmp.eq.s32.totalorder %s22, 1
      %p143 = por %p141, %p142
      %p144 = scmp.ne.s32.totalorder %s133, %s134
      %p145 = scmp.eq.s32.totalorder %s22, 0
      %p146 = por %p144, %p145
      %p147 = scmp.ne.s32.totalorder %s133, %s134
      %p148 = scmp.eq.s32.totalorder %s23, 1
      %p149 = por %p147, %p148
      %p151 = scmp.ne.s32.totalorder %s134, %s150
      %p152 = scmp.eq.s32.totalorder %s23, 0
      %p153 = por %p151, %p152
      %p154 = scmp.le.s32.totalorder 1, %s17
      %p155 = scmp.lt.s32.totalorder %s17, 3
      %p156 = pnand %p154, %p155
      %p157 = pneg %p156
      // Predicated region
      $region9: #{tpu_custom_call.1} parent=5 // pred_check
        _
      $region10: #{tpu_custom_call.1} parent=5 // pred_check_branch
        %159 = sbr.rel (%p156) target = $region12
      $region11: #{tpu_custom_call.1} parent=5 // pred_region
        %s160 = ssub.s32 %s17, 1
        // Predicated region
        $region13: #{tpu_custom_call.1} parent=11 // pred_check
          %p161 = pneg %p76
        $region14: #{tpu_custom_call.1} parent=11 // pred_check_branch
          %163 = sbr.rel (%p161) target = $region16
        $region15: #{tpu_custom_call.1} parent=11 // pred_region
          %s165 = ssub.s32 6144, 6144
          %166 = vsyncadd [#allocation10], %s165
          %s167 = sshll.u32 [#allocation9], 4
          %s168 = int_to_ptr.vmem [resolvable:$true] %s167
          %173 = dma.hbm_to_vmem [thread:$0]  %s1, 6144, %s168, [#allocation10], 384, 384, 24
        $region16: #{tpu_custom_call.1} parent=11 // pred_fallthru
          _
        // Predicated region
        $region17: #{tpu_custom_call.1} parent=11 // pred_check
          %p174 = pneg %p97
        $region18: #{tpu_custom_call.1} parent=11 // pred_check_branch
          %176 = sbr.rel (%p174) target = $region20
        $region19: #{tpu_custom_call.1} parent=11 // pred_region
          %s178 = ssub.s32 2048, 2048
          %179 = vsyncadd [#allocation10], %s178
          %s180 = sshll.u32 [#allocation11], 4
          %s181 = int_to_ptr.vmem [resolvable:$true] %s180
          %186 = dma.hbm_to_vmem [thread:$0]  %s2, 2048, %s181, [#allocation10], 128, 128, 8
        $region20: #{tpu_custom_call.1} parent=11 // pred_fallthru
          _
        // Predicated region
        $region21: #{tpu_custom_call.1} parent=11 // pred_check
          %p187 = pneg %p118
        $region22: #{tpu_custom_call.1} parent=11 // pred_check_branch
          %189 = sbr.rel (%p187) target = $region24
        $region23: #{tpu_custom_call.1} parent=11 // pred_region
          _
        $region24: #{tpu_custom_call.1} parent=11 // pred_fallthru
          _
      $region12: #{tpu_custom_call.1} parent=5 // pred_fallthru
        _
      %p190 = scmp.lt.s32.totalorder %s17, 2
      // Predicated region
      $region25: #{tpu_custom_call.1} parent=5 // pred_check
        %p191 = pneg %p190
      $region26: #{tpu_custom_call.1} parent=5 // pred_check_branch
        %193 = sbr.rel (%p191) target = $region28
      $region27: #{tpu_custom_call.1} parent=5 // pred_region
        // Predicated region
        $region29: #{tpu_custom_call.1} parent=27 // pred_check
          %p194 = pneg %p49
        $region30: #{tpu_custom_call.1} parent=27 // pred_check_branch
          %196 = sbr.rel (%p194) target = $region32
        $region31: #{tpu_custom_call.1} parent=27 // pred_region
          %s197 = sand.u32 %s39, 1
          %s198 = scalar_lea.sflag [#allocation7], %s197
          %s199 = sand.u32 %s39, 1
          %s200 = smul.addr %s199, 128
          %s201 = scalar_lea.vmem [#allocation6], %s200
          %s203 = ssub.s32 2048, 2048
          %204 = vsyncadd %s198, %s203
          %s205 = smul.addr %s24, 16
          %s206 = smul.addr %s205, 128
          %s207 = scalar_lea.hbm %s0, %s206
          %s208 = sshll.u32 %s201, 4
          %s209 = int_to_ptr.vmem [resolvable:$true] %s208
          %214 = dma.hbm_to_vmem [thread:$0]  %s207, 2048, %s209, %s198, 128, 128, 8
        $region32: #{tpu_custom_call.1} parent=27 // pred_fallthru
          _
      $region28: #{tpu_custom_call.1} parent=5 // pred_fallthru
        _
      %p215 = scmp.le.s32.totalorder 1, %s17
      %p216 = scmp.lt.s32.totalorder %s17, 3
      %p217 = pnand %p215, %p216
      %p218 = pneg %p217
      // Predicated region
      $region33: #{tpu_custom_call.1} parent=5 // pred_check
        _
      $region34: #{tpu_custom_call.1} parent=5 // pred_check_branch
        %220 = sbr.rel (%p217) target = $region36
      $region35: #{tpu_custom_call.1} parent=5 // pred_region
        %s221 = ssub.s32 %s17, 1
        %s222 = sand.u32 %s42, 1
        %s223 = scalar_lea.sflag [#allocation7], %s222
        %s224 = sand.u32 %s42, 1
        %s225 = smul.addr %s224, 128
        %s226 = scalar_lea.vmem [#allocation6], %s225
        // Predicated region
        $region37: #{tpu_custom_call.1} parent=35 // pred_check
          %p227 = pneg %p55
        $region38: #{tpu_custom_call.1} parent=35 // pred_check_branch
          %229 = sbr.rel (%p227) target = $region40
        $region39: #{tpu_custom_call.1} parent=35 // pred_region
          %230 = dma.done %s223, 2048
        $region40: #{tpu_custom_call.1} parent=35 // pred_fallthru
          _
        // Predicated region
        $region41: #{tpu_custom_call.1} parent=35 // pred_check
          %p231 = pneg %p76
        $region42: #{tpu_custom_call.1} parent=35 // pred_check_branch
          %233 = sbr.rel (%p231) target = $region44
        $region43: #{tpu_custom_call.1} parent=35 // pred_region
          %234 = dma.done [#allocation10], 6144
        $region44: #{tpu_custom_call.1} parent=35 // pred_fallthru
          _
        // Predicated region
        $region45: #{tpu_custom_call.1} parent=35 // pred_check
          %p235 = pneg %p97
        $region46: #{tpu_custom_call.1} parent=35 // pred_check_branch
          %237 = sbr.rel (%p235) target = $region48
        $region47: #{tpu_custom_call.1} parent=35 // pred_region
          %238 = dma.done [#allocation10], 2048
        $region48: #{tpu_custom_call.1} parent=35 // pred_fallthru
          _
        %s239 = sand.u32 %s42, 1
        %s240 = scalar_lea.sflag [#allocation7], %s239
        %s241 = sand.u32 %s42, 1
        %s242 = smul.addr %s241, 128
        %s243 = scalar_lea.vmem [#allocation6], %s242
        %p244 = pneg %p55
        %p245 = pneg %p52
        %p246 = pneg %p76
        %p247 = pneg %p73
        %p248 = pneg %p97
        %p249 = pneg %p94
        %p250 = pneg %p118
        %p251 = pneg %p115
        %p252 = pneg %p146
        %p253 = pneg %p143
        %s254 = sand.u32 %s133, 1
        %s255 = scalar_lea.sflag [#allocation8], %s254
        %s256 = sand.u32 %s133, 1
        %s257 = smul.addr %s256, 128
        %s258 = scalar_lea.vmem [#allocation12], %s257
        %s259 = smul.u32 16, %s27
        %p260 = scmp.eq.s32.totalorder %s27, 0
        // Predicated region
        $region49: #{tpu_custom_call.1} parent=35 // pred_check
          %p261 = pneg %p260
        $region50: #{tpu_custom_call.1} parent=35 // pred_check_branch
          %263 = sbr.rel (%p261) target = $region52
        $region51: #{tpu_custom_call.1} parent=35 // pred_region
          %v264 = vld [vmem:[%s226] sm:$0xff]
          %v265 = vld [vmem:[%s226 + $0x8] sm:$0xff]
          %v266 = vld [vmem:[%s226 + $0x10] sm:$0xff]
          %v267 = vld [vmem:[%s226 + $0x18] sm:$0xff]
          %v268 = vld [vmem:[%s226 + $0x20] sm:$0xff]
          %v269 = vld [vmem:[%s226 + $0x28] sm:$0xff]
          %v270 = vld [vmem:[%s226 + $0x30] sm:$0xff]
          %v271 = vld [vmem:[%s226 + $0x38] sm:$0xff]
          %v272 = vld [vmem:[%s226 + $0x40] sm:$0xff]
          %v273 = vld [vmem:[%s226 + $0x48] sm:$0xff]
          %v274 = vld [vmem:[%s226 + $0x50] sm:$0xff]
          %v275 = vld [vmem:[%s226 + $0x58] sm:$0xff]
          %v276 = vld [vmem:[%s226 + $0x60] sm:$0xff]
          %v277 = vld [vmem:[%s226 + $0x68] sm:$0xff]
          %v278 = vld [vmem:[%s226 + $0x70] sm:$0xff]
          %v279 = vld [vmem:[%s226 + $0x78] sm:$0xff]
          %v280 = vld [vmem:[#allocation9] sm:$0xff]
          %v281 = vld [vmem:[#allocation9 + $0x8] sm:$0xff]
          %v282 = vld [vmem:[#allocation9 + $0x10] sm:$0xff]
          %v283 = vld [vmem:[#allocation9 + $0x18] sm:$0xff]
          %v284 = vld [vmem:[#allocation9 + $0x20] sm:$0xff]
          %v285 = vld [vmem:[#allocation9 + $0x28] sm:$0xff]
          %v286 = vld [vmem:[#allocation9 + $0x30] sm:$0xff]
          %v287 = vld [vmem:[#allocation9 + $0x38] sm:$0xff]
          %v288 = vld [vmem:[#allocation9 + $0x40] sm:$0xff]
          %v289 = vld [vmem:[#allocation9 + $0x48] sm:$0xff]
          %v290 = vld [vmem:[#allocation9 + $0x50] sm:$0xff]
          %v291 = vld [vmem:[#allocation9 + $0x58] sm:$0xff]
          %v292 = vld [vmem:[#allocation9 + $0x60] sm:$0xff]
          %v293 = vld [vmem:[#allocation9 + $0x68] sm:$0xff]
          %v294 = vld [vmem:[#allocation9 + $0x70] sm:$0xff]
          %v295 = vld [vmem:[#allocation9 + $0x78] sm:$0xff]
          %v296 = vld [vmem:[#allocation9 + $0x80] sm:$0xff]
          %v297 = vld [vmem:[#allocation9 + $0x88] sm:$0xff]
          %v298 = vld [vmem:[#allocation9 + $0x90] sm:$0xff]
          %v299 = vld [vmem:[#allocation9 + $0x98] sm:$0xff]
          %v300 = vld [vmem:[#allocation9 + $0xa0] sm:$0xff]
          %v301 = vld [vmem:[#allocation9 + $0xa8] sm:$0xff]
          %v302 = vld [vmem:[#allocation9 + $0xb0] sm:$0xff]
          %v303 = vld [vmem:[#allocation9 + $0xb8] sm:$0xff]
          %v304 = vld [vmem:[#allocation9 + $0xc0] sm:$0xff]
          %v305 = vld [vmem:[#allocation9 + $0xc8] sm:$0xff]
          %v306 = vld [vmem:[#allocation9 + $0xd0] sm:$0xff]
          %v307 = vld [vmem:[#allocation9 + $0xd8] sm:$0xff]
          %v308 = vld [vmem:[#allocation9 + $0xe0] sm:$0xff]
          %v309 = vld [vmem:[#allocation9 + $0xe8] sm:$0xff]
          %v310 = vld [vmem:[#allocation9 + $0xf0] sm:$0xff]
          %v311 = vld [vmem:[#allocation9 + $0xf8] sm:$0xff]
          %v312 = vld [vmem:[#allocation9 + $0x100] sm:$0xff]
          %v313 = vld [vmem:[#allocation9 + $0x108] sm:$0xff]
          %v314 = vld [vmem:[#allocation9 + $0x110] sm:$0xff]
          %v315 = vld [vmem:[#allocation9 + $0x118] sm:$0xff]
          %v316 = vld [vmem:[#allocation9 + $0x120] sm:$0xff]
          %v317 = vld [vmem:[#allocation9 + $0x128] sm:$0xff]
          %v318 = vld [vmem:[#allocation9 + $0x130] sm:$0xff]
          %v319 = vld [vmem:[#allocation9 + $0x138] sm:$0xff]
          %v320 = vld [vmem:[#allocation9 + $0x140] sm:$0xff]
          %v321 = vld [vmem:[#allocation9 + $0x148] sm:$0xff]
          %v322 = vld [vmem:[#allocation9 + $0x150] sm:$0xff]
          %v323 = vld [vmem:[#allocation9 + $0x158] sm:$0xff]
          %v324 = vld [vmem:[#allocation9 + $0x160] sm:$0xff]
          %v325 = vld [vmem:[#allocation9 + $0x168] sm:$0xff]
          %v326 = vld [vmem:[#allocation9 + $0x170] sm:$0xff]
          %v327 = vld [vmem:[#allocation9 + $0x178] sm:$0xff]
          %328 = vmatprep.subr.mxu0 %v326
          %329 = vmatpush1.msra.mxu0 %v325
          %330 = vmatprep.subr.mxu0 %v323
          %331 = vmatpush1.msra.mxu0 %v322
          %332 = vmatprep.subr.mxu0 %v320
          %333 = vmatpush1.msra.mxu0 %v319
          %334 = vmatprep.subr.mxu0 %v317
          %335 = vmatpush1.msra.mxu0 %v316
          %336 = vmatprep.subr.mxu0 %v314
          %337 = vmatpush1.msra.mxu0 %v313
          %338 = vmatprep.subr.mxu0 %v311
          %339 = vmatpush1.msra.mxu0 %v310
          %340 = vmatprep.subr.mxu0 %v308
          %341 = vmatpush1.msra.mxu0 %v307
          %342 = vmatprep.subr.mxu0 %v305
          %343 = vmatpush1.msra.mxu0 %v304
          %344 = vmatprep.subr.mxu0 %v302
          %345 = vmatpush1.msra.mxu0 %v301
          %346 = vmatprep.subr.mxu0 %v299
          %347 = vmatpush1.msra.mxu0 %v298
          %348 = vmatprep.subr.mxu0 %v296
          %349 = vmatpush1.msra.mxu0 %v295
          %350 = vmatprep.subr.mxu0 %v293
          %351 = vmatpush1.msra.mxu0 %v292
          %352 = vmatprep.subr.mxu0 %v290
          %353 = vmatpush1.msra.mxu0 %v289
          %354 = vmatprep.subr.mxu0 %v287
          %355 = vmatpush1.msra.mxu0 %v286
          %356 = vmatprep.subr.mxu0 %v284
          %357 = vmatpush1.msra.mxu0 %v283
          %358 = vmatprep.subr.mxu0 %v281
          %359 = vmatpush1.msra.mxu0 %v280
          %360 = vmatprep.subr.mxu0 0.0
          %361 = vmatpush2.msra.mxu0 0.0
          %362 = vmatprep.subr.mxu0 0.0
          %363 = vmatpush2.msra.mxu0 0.0
          %364 = vmatprep.subr.mxu0 0.0
          %365 = vmatpush2.msra.mxu0 0.0
          %366 = vmatprep.subr.mxu0 0.0
          %367 = vmatpush2.msra.mxu0 0.0
          %368 = vmatprep.subr.mxu0 0.0
          %369 = vmatpush2.msra.mxu0 0.0
          %370 = vmatprep.subr.mxu0 0.0
          %371 = vmatpush2.msra.mxu0 0.0
          %372 = vmatprep.subr.mxu0 0.0
          %373 = vmatpush2.msra.mxu0 0.0
          %374 = vmatprep.subr.mxu0 0.0
          %375 = vmatpush2.msra.mxu0 0.0
          %376 = vmatprep.subr.mxu0 0.0
          %377 = vmatpush2.msra.mxu0 0.0
          %378 = vmatprep.subr.mxu0 0.0
          %379 = vmatpush2.msra.mxu0 0.0
          %380 = vmatprep.subr.mxu0 0.0
          %381 = vmatpush2.msra.mxu0 0.0
          %382 = vmatprep.subr.mxu0 0.0
          %383 = vmatpush2.msra.mxu0 0.0
          %384 = vmatprep.subr.mxu0 0.0
          %385 = vmatpush2.msra.mxu0 0.0
          %386 = vmatprep.subr.mxu0 0.0
          %387 = vmatpush2.msra.mxu0 0.0
          %388 = vmatprep.subr.mxu0 0.0
          %389 = vmatpush2.msra.mxu0 0.0
          %390 = vmatprep.subr.mxu0 0.0
          %391 = vmatpush2.msra.mxu0 0.0
          %392 = vmatprep.mubr.f32.mxu0 0.0
          %393 = vmatmul.mubr.f32.gmra.mxu0 %v264
          %v394 = vpop.f32.mrf.mxu0
          %v395 = vadd.f32 0.0, %v394
          %v396 = vpop.f32.mrf.mxu0
          %v397 = vadd.f32 0.0, %v396
          %398 = vmatprep.mubr.f32.mxu0 0.0
          %399 = vmatmul.mubr.f32.gmra.mxu0 %v265
          %v400 = vpop.f32.mrf.mxu0
          %v401 = vadd.f32 0.0, %v400
          %v402 = vpop.f32.mrf.mxu0
          %v403 = vadd.f32 0.0, %v402
          %404 = vmatprep.mubr.f32.mxu0 0.0
          %405 = vmatmul.mubr.f32.gmra.mxu0 %v266
          %v406 = vpop.f32.mrf.mxu0
          %v407 = vadd.f32 0.0, %v406
          %v408 = vpop.f32.mrf.mxu0
          %v409 = vadd.f32 0.0, %v408
          %410 = vmatprep.mubr.f32.mxu0 0.0
          %411 = vmatmul.mubr.f32.gmra.mxu0 %v267
          %v412 = vpop.f32.mrf.mxu0
          %v413 = vadd.f32 0.0, %v412
          %v414 = vpop.f32.mrf.mxu0
          %v415 = vadd.f32 0.0, %v414
          %416 = vmatprep.mubr.f32.mxu0 0.0
          %417 = vmatmul.mubr.f32.gmra.mxu0 %v268
          %v418 = vpop.f32.mrf.mxu0
          %v419 = vadd.f32 0.0, %v418
          %v420 = vpop.f32.mrf.mxu0
          %v421 = vadd.f32 0.0, %v420
          %422 = vmatprep.mubr.f32.mxu0 0.0
          %423 = vmatmul.mubr.f32.gmra.mxu0 %v269
          %v424 = vpop.f32.mrf.mxu0
          %v425 = vadd.f32 0.0, %v424
          %v426 = vpop.f32.mrf.mxu0
          %v427 = vadd.f32 0.0, %v426
          %428 = vmatprep.mubr.f32.mxu0 0.0
          %429 = vmatmul.mubr.f32.gmra.mxu0 %v270
          %v430 = vpop.f32.mrf.mxu0
          %v431 = vadd.f32 0.0, %v430
          %v432 = vpop.f32.mrf.mxu0
          %v433 = vadd.f32 0.0, %v432
          %434 = vmatprep.mubr.f32.mxu0 0.0
          %435 = vmatmul.mubr.f32.gmra.mxu0 %v271
          %v436 = vpop.f32.mrf.mxu0
          %v437 = vadd.f32 0.0, %v436
          %v438 = vpop.f32.mrf.mxu0
          %v439 = vadd.f32 0.0, %v438
          %440 = vmatprep.mubr.f32.mxu0 0.0
          %441 = vmatmul.mubr.f32.gmra.mxu0 %v272
          %v442 = vpop.f32.mrf.mxu0
          %v443 = vadd.f32 0.0, %v442
          %v444 = vpop.f32.mrf.mxu0
          %v445 = vadd.f32 0.0, %v444
          %446 = vmatprep.mubr.f32.mxu0 0.0
          %447 = vmatmul.mubr.f32.gmra.mxu0 %v273
          %v448 = vpop.f32.mrf.mxu0
          %v449 = vadd.f32 0.0, %v448
          %v450 = vpop.f32.mrf.mxu0
          %v451 = vadd.f32 0.0, %v450
          %452 = vmatprep.mubr.f32.mxu0 0.0
          %453 = vmatmul.mubr.f32.gmra.mxu0 %v274
          %v454 = vpop.f32.mrf.mxu0
          %v455 = vadd.f32 0.0, %v454
          %v456 = vpop.f32.mrf.mxu0
          %v457 = vadd.f32 0.0, %v456
          %458 = vmatprep.mubr.f32.mxu0 0.0
          %459 = vmatmul.mubr.f32.gmra.mxu0 %v275
          %v460 = vpop.f32.mrf.mxu0
          %v461 = vadd.f32 0.0, %v460
          %v462 = vpop.f32.mrf.mxu0
          %v463 = vadd.f32 0.0, %v462
          %464 = vmatprep.mubr.f32.mxu0 0.0
          %465 = vmatmul.mubr.f32.gmra.mxu0 %v276
          %v466 = vpop.f32.mrf.mxu0
          %v467 = vadd.f32 0.0, %v466
          %v468 = vpop.f32.mrf.mxu0
          %v469 = vadd.f32 0.0, %v468
          %470 = vmatprep.mubr.f32.mxu0 0.0
          %471 = vmatmul.mubr.f32.gmra.mxu0 %v277
          %v472 = vpop.f32.mrf.mxu0
          %v473 = vadd.f32 0.0, %v472
          %v474 = vpop.f32.mrf.mxu0
          %v475 = vadd.f32 0.0, %v474
          %476 = vmatprep.mubr.f32.mxu0 0.0
          %477 = vmatmul.mubr.f32.gmra.mxu0 %v278
          %v478 = vpop.f32.mrf.mxu0
          %v479 = vadd.f32 0.0, %v478
          %v480 = vpop.f32.mrf.mxu0
          %v481 = vadd.f32 0.0, %v480
          %482 = vmatprep.mubr.f32.mxu0 0.0
          %483 = vmatmul.mubr.f32.gmra.mxu0 %v279
          %v484 = vpop.f32.mrf.mxu0
          %v485 = vadd.f32 0.0, %v484
          %v486 = vpop.f32.mrf.mxu0
          %v487 = vadd.f32 0.0, %v486
          %488 = vdwg.mxu0
          %489 = vmatprep.subr.mxu0 0.0
          %490 = vmatpush1.msra.mxu0 %v327
          %491 = vmatprep.subr.mxu0 0.0
          %492 = vmatpush1.msra.mxu0 %v324
          %493 = vmatprep.subr.mxu0 0.0
          %494 = vmatpush1.msra.mxu0 %v321
          %495 = vmatprep.subr.mxu0 0.0
          %496 = vmatpush1.msra.mxu0 %v318
          %497 = vmatprep.subr.mxu0 0.0
          %498 = vmatpush1.msra.mxu0 %v315
          %499 = vmatprep.subr.mxu0 0.0
          %500 = vmatpush1.msra.mxu0 %v312
          %501 = vmatprep.subr.mxu0 0.0
          %502 = vmatpush1.msra.mxu0 %v309
          %503 = vmatprep.subr.mxu0 0.0
          %504 = vmatpush1.msra.mxu0 %v306
          %505 = vmatprep.subr.mxu0 0.0
          %506 = vmatpush1.msra.mxu0 %v303
          %507 = vmatprep.subr.mxu0 0.0
          %508 = vmatpush1.msra.mxu0 %v300
          %509 = vmatprep.subr.mxu0 0.0
          %510 = vmatpush1.msra.mxu0 %v297
          %511 = vmatprep.subr.mxu0 0.0
          %512 = vmatpush1.msra.mxu0 %v294
          %513 = vmatprep.subr.mxu0 0.0
          %514 = vmatpush1.msra.mxu0 %v291
          %515 = vmatprep.subr.mxu0 0.0
          %516 = vmatpush1.msra.mxu0 %v288
          %517 = vmatprep.subr.mxu0 0.0
          %518 = vmatpush1.msra.mxu0 %v285
          %519 = vmatprep.subr.mxu0 0.0
          %520 = vmatpush1.msra.mxu0 %v282
          %521 = vmatprep.subr.mxu0 0.0
          %522 = vmatpush2.msra.mxu0 0.0
          %523 = vmatprep.subr.mxu0 0.0
          %524 = vmatpush2.msra.mxu0 0.0
          %525 = vmatprep.subr.mxu0 0.0
          %526 = vmatpush2.msra.mxu0 0.0
          %527 = vmatprep.subr.mxu0 0.0
          %528 = vmatpush2.msra.mxu0 0.0
          %529 = vmatprep.subr.mxu0 0.0
          %530 = vmatpush2.msra.mxu0 0.0
          %531 = vmatprep.subr.mxu0 0.0
          %532 = vmatpush2.msra.mxu0 0.0
          %533 = vmatprep.subr.mxu0 0.0
          %534 = vmatpush2.msra.mxu0 0.0
          %535 = vmatprep.subr.mxu0 0.0
          %536 = vmatpush2.msra.mxu0 0.0
          %537 = vmatprep.subr.mxu0 0.0
          %538 = vmatpush2.msra.mxu0 0.0
          %539 = vmatprep.subr.mxu0 0.0
          %540 = vmatpush2.msra.mxu0 0.0
          %541 = vmatprep.subr.mxu0 0.0
          %542 = vmatpush2.msra.mxu0 0.0
          %543 = vmatprep.subr.mxu0 0.0
          %544 = vmatpush2.msra.mxu0 0.0
          %545 = vmatprep.subr.mxu0 0.0
          %546 = vmatpush2.msra.mxu0 0.0
          %547 = vmatprep.subr.mxu0 0.0
          %548 = vmatpush2.msra.mxu0 0.0
          %549 = vmatprep.subr.mxu0 0.0
          %550 = vmatpush2.msra.mxu0 0.0
          %551 = vmatprep.subr.mxu0 0.0
          %552 = vmatpush2.msra.mxu0 0.0
          %553 = vmatprep.mubr.f32.mxu0 0.0
          %554 = vmatmul.mubr.f32.gmra.mxu0 %v264
          %v555 = vpop.f32.mrf.mxu0
          %v556 = vadd.f32 0.0, %v555
          %v557 = vpop.f32.mrf.mxu0
          %558 = vmatprep.mubr.f32.mxu0 0.0
          %559 = vmatmul.mubr.f32.gmra.mxu0 %v265
          %v560 = vpop.f32.mrf.mxu0
          %v561 = vadd.f32 0.0, %v560
          %v562 = vpop.f32.mrf.mxu0
          %563 = vmatprep.mubr.f32.mxu0 0.0
          %564 = vmatmul.mubr.f32.gmra.mxu0 %v266
          %v565 = vpop.f32.mrf.mxu0
          %v566 = vadd.f32 0.0, %v565
          %v567 = vpop.f32.mrf.mxu0
          %568 = vmatprep.mubr.f32.mxu0 0.0
          %569 = vmatmul.mubr.f32.gmra.mxu0 %v267
          %v570 = vpop.f32.mrf.mxu0
          %v571 = vadd.f32 0.0, %v570
          %v572 = vpop.f32.mrf.mxu0
          %573 = vmatprep.mubr.f32.mxu0 0.0
          %574 = vmatmul.mubr.f32.gmra.mxu0 %v268
          %v575 = vpop.f32.mrf.mxu0
          %v576 = vadd.f32 0.0, %v575
          %v577 = vpop.f32.mrf.mxu0
          %578 = vmatprep.mubr.f32.mxu0 0.0
          %579 = vmatmul.mubr.f32.gmra.mxu0 %v269
          %v580 = vpop.f32.mrf.mxu0
          %v581 = vadd.f32 0.0, %v580
          %v582 = vpop.f32.mrf.mxu0
          %583 = vmatprep.mubr.f32.mxu0 0.0
          %584 = vmatmul.mubr.f32.gmra.mxu0 %v270
          %v585 = vpop.f32.mrf.mxu0
          %v586 = vadd.f32 0.0, %v585
          %v587 = vpop.f32.mrf.mxu0
          %588 = vmatprep.mubr.f32.mxu0 0.0
          %589 = vmatmul.mubr.f32.gmra.mxu0 %v271
          %v590 = vpop.f32.mrf.mxu0
          %v591 = vadd.f32 0.0, %v590
          %v592 = vpop.f32.mrf.mxu0
          %593 = vmatprep.mubr.f32.mxu0 0.0
          %594 = vmatmul.mubr.f32.gmra.mxu0 %v272
          %v595 = vpop.f32.mrf.mxu0
          %v596 = vadd.f32 0.0, %v595
          %v597 = vpop.f32.mrf.mxu0
          %598 = vmatprep.mubr.f32.mxu0 0.0
          %599 = vmatmul.mubr.f32.gmra.mxu0 %v273
          %v600 = vpop.f32.mrf.mxu0
          %v601 = vadd.f32 0.0, %v600
          %v602 = vpop.f32.mrf.mxu0
          %603 = vmatprep.mubr.f32.mxu0 0.0
          %604 = vmatmul.mubr.f32.gmra.mxu0 %v274
          %v605 = vpop.f32.mrf.mxu0
          %v606 = vadd.f32 0.0, %v605
          %v607 = vpop.f32.mrf.mxu0
          %608 = vmatprep.mubr.f32.mxu0 0.0
          %609 = vmatmul.mubr.f32.gmra.mxu0 %v275
          %v610 = vpop.f32.mrf.mxu0
          %v611 = vadd.f32 0.0, %v610
          %v612 = vpop.f32.mrf.mxu0
          %613 = vmatprep.mubr.f32.mxu0 0.0
          %614 = vmatmul.mubr.f32.gmra.mxu0 %v276
          %v615 = vpop.f32.mrf.mxu0
          %v616 = vadd.f32 0.0, %v615
          %v617 = vpop.f32.mrf.mxu0
          %618 = vmatprep.mubr.f32.mxu0 0.0
          %619 = vmatmul.mubr.f32.gmra.mxu0 %v277
          %v620 = vpop.f32.mrf.mxu0
          %v621 = vadd.f32 0.0, %v620
          %v622 = vpop.f32.mrf.mxu0
          %623 = vmatprep.mubr.f32.mxu0 0.0
          %624 = vmatmul.mubr.f32.gmra.mxu0 %v278
          %v625 = vpop.f32.mrf.mxu0
          %v626 = vadd.f32 0.0, %v625
          %v627 = vpop.f32.mrf.mxu0
          %628 = vmatprep.mubr.f32.mxu0 0.0
          %629 = vmatmul.mubr.f32.gmra.mxu0 %v279
          %v630 = vpop.f32.mrf.mxu0
          %v631 = vadd.f32 0.0, %v630
          %v632 = vpop.f32.mrf.mxu0
          %633 = vdwg.mxu0
          %634 = vst [vmem:[#allocation2] sm:$0xff] %v395
          %635 = vst [vmem:[#allocation2 + $0x8] sm:$0xff] %v401
          %636 = vst [vmem:[#allocation2 + $0x10] sm:$0xff] %v407
          %637 = vst [vmem:[#allocation2 + $0x18] sm:$0xff] %v413
          %638 = vst [vmem:[#allocation2 + $0x20] sm:$0xff] %v419
          %639 = vst [vmem:[#allocation2 + $0x28] sm:$0xff] %v425
          %640 = vst [vmem:[#allocation2 + $0x30] sm:$0xff] %v431
          %641 = vst [vmem:[#allocation2 + $0x38] sm:$0xff] %v437
          %642 = vst [vmem:[#allocation2 + $0x40] sm:$0xff] %v443
          %643 = vst [vmem:[#allocation2 + $0x48] sm:$0xff] %v449
          %644 = vst [vmem:[#allocation2 + $0x50] sm:$0xff] %v455
          %645 = vst [vmem:[#allocation2 + $0x58] sm:$0xff] %v461
          %646 = vst [vmem:[#allocation2 + $0x60] sm:$0xff] %v467
          %647 = vst [vmem:[#allocation2 + $0x68] sm:$0xff] %v473
          %648 = vst [vmem:[#allocation2 + $0x70] sm:$0xff] %v479
          %649 = vst [vmem:[#allocation2 + $0x78] sm:$0xff] %v485
          %650 = vst [vmem:[#allocation3] sm:$0xff] %v397
          %651 = vst [vmem:[#allocation3 + $0x8] sm:$0xff] %v403
          %652 = vst [vmem:[#allocation3 + $0x10] sm:$0xff] %v409
          %653 = vst [vmem:[#allocation3 + $0x18] sm:$0xff] %v415
          %654 = vst [vmem:[#allocation3 + $0x20] sm:$0xff] %v421
          %655 = vst [vmem:[#allocation3 + $0x28] sm:$0xff] %v427
          %656 = vst [vmem:[#allocation3 + $0x30] sm:$0xff] %v433
          %657 = vst [vmem:[#allocation3 + $0x38] sm:$0xff] %v439
          %658 = vst [vmem:[#allocation3 + $0x40] sm:$0xff] %v445
          %659 = vst [vmem:[#allocation3 + $0x48] sm:$0xff] %v451
          %660 = vst [vmem:[#allocation3 + $0x50] sm:$0xff] %v457
          %661 = vst [vmem:[#allocation3 + $0x58] sm:$0xff] %v463
          %662 = vst [vmem:[#allocation3 + $0x60] sm:$0xff] %v469
          %663 = vst [vmem:[#allocation3 + $0x68] sm:$0xff] %v475
          %664 = vst [vmem:[#allocation3 + $0x70] sm:$0xff] %v481
          %665 = vst [vmem:[#allocation3 + $0x78] sm:$0xff] %v487
          %666 = vst [vmem:[#allocation4] sm:$0xff] %v556
          %667 = vst [vmem:[#allocation4 + $0x8] sm:$0xff] %v561
          %668 = vst [vmem:[#allocation4 + $0x10] sm:$0xff] %v566
          %669 = vst [vmem:[#allocation4 + $0x18] sm:$0xff] %v571
          %670 = vst [vmem:[#allocation4 + $0x20] sm:$0xff] %v576
          %671 = vst [vmem:[#allocation4 + $0x28] sm:$0xff] %v581
          %672 = vst [vmem:[#allocation4 + $0x30] sm:$0xff] %v586
          %673 = vst [vmem:[#allocation4 + $0x38] sm:$0xff] %v591
          %674 = vst [vmem:[#allocation4 + $0x40] sm:$0xff] %v596
          %675 = vst [vmem:[#allocation4 + $0x48] sm:$0xff] %v601
          %676 = vst [vmem:[#allocation4 + $0x50] sm:$0xff] %v606
          %677 = vst [vmem:[#allocation4 + $0x58] sm:$0xff] %v611
          %678 = vst [vmem:[#allocation4 + $0x60] sm:$0xff] %v616
          %679 = vst [vmem:[#allocation4 + $0x68] sm:$0xff] %v621
          %680 = vst [vmem:[#allocation4 + $0x70] sm:$0xff] %v626
          %681 = vst [vmem:[#allocation4 + $0x78] sm:$0xff] %v631
        $region52: #{tpu_custom_call.1} parent=35 // pred_fallthru
          _
        %s682 = smul.u32 %s27, 128
        %s683 = scalar_lea.vmem [#allocation2], %s682
        %v684 = vld [vmem:[%s683] sm:$0xff]
        %v685 = vld [vmem:[%s683 + $0x8] sm:$0xff]
        %v686 = vld [vmem:[%s683 + $0x10] sm:$0xff]
        %v687 = vld [vmem:[%s683 + $0x18] sm:$0xff]
        %v688 = vld [vmem:[%s683 + $0x20] sm:$0xff]
        %v689 = vld [vmem:[%s683 + $0x28] sm:$0xff]
        %v690 = vld [vmem:[%s683 + $0x30] sm:$0xff]
        %v691 = vld [vmem:[%s683 + $0x38] sm:$0xff]
        %v692 = vld [vmem:[%s683 + $0x40] sm:$0xff]
        %v693 = vld [vmem:[%s683 + $0x48] sm:$0xff]
        %v694 = vld [vmem:[%s683 + $0x50] sm:$0xff]
        %v695 = vld [vmem:[%s683 + $0x58] sm:$0xff]
        %v696 = vld [vmem:[%s683 + $0x60] sm:$0xff]
        %v697 = vld [vmem:[%s683 + $0x68] sm:$0xff]
        %v698 = vld [vmem:[%s683 + $0x70] sm:$0xff]
        %v699 = vld [vmem:[%s683 + $0x78] sm:$0xff]
        %v700 = vlaneseq
        %v701 = vand.u32 %v700, 127
        %vm702 = vcmp.lt.s32.totalorder %v701, 77
        %v703 = vld [vmem:[#allocation3] sm:$0xff]
        %v704 = vld [vmem:[#allocation3 + $0x8] sm:$0xff]
        %v705 = vld [vmem:[#allocation3 + $0x10] sm:$0xff]
        %v706 = vld [vmem:[#allocation3 + $0x18] sm:$0xff]
        %v707 = vld [vmem:[#allocation3 + $0x20] sm:$0xff]
        %v708 = vld [vmem:[#allocation3 + $0x28] sm:$0xff]
        %v709 = vld [vmem:[#allocation3 + $0x30] sm:$0xff]
        %v710 = vld [vmem:[#allocation3 + $0x38] sm:$0xff]
        %v711 = vld [vmem:[#allocation3 + $0x40] sm:$0xff]
        %v712 = vld [vmem:[#allocation3 + $0x48] sm:$0xff]
        %v713 = vld [vmem:[#allocation3 + $0x50] sm:$0xff]
        %v714 = vld [vmem:[#allocation3 + $0x58] sm:$0xff]
        %v715 = vld [vmem:[#allocation3 + $0x60] sm:$0xff]
        %v716 = vld [vmem:[#allocation3 + $0x68] sm:$0xff]
        %v717 = vld [vmem:[#allocation3 + $0x70] sm:$0xff]
        %v718 = vld [vmem:[#allocation3 + $0x78] sm:$0xff]
        %v719 = vld [vmem:[#allocation4] sm:$0xff]
        %v720 = vld [vmem:[#allocation4 + $0x8] sm:$0xff]
        %v721 = vld [vmem:[#allocation4 + $0x10] sm:$0xff]
        %v722 = vld [vmem:[#allocation4 + $0x18] sm:$0xff]
        %v723 = vld [vmem:[#allocation4 + $0x20] sm:$0xff]
        %v724 = vld [vmem:[#allocation4 + $0x28] sm:$0xff]
        %v725 = vld [vmem:[#allocation4 + $0x30] sm:$0xff]
        %v726 = vld [vmem:[#allocation4 + $0x38] sm:$0xff]
        %v727 = vld [vmem:[#allocation4 + $0x40] sm:$0xff]
        %v728 = vld [vmem:[#allocation4 + $0x48] sm:$0xff]
        %v729 = vld [vmem:[#allocation4 + $0x50] sm:$0xff]
        %v730 = vld [vmem:[#allocation4 + $0x58] sm:$0xff]
        %v731 = vld [vmem:[#allocation4 + $0x60] sm:$0xff]
        %v732 = vld [vmem:[#allocation4 + $0x68] sm:$0xff]
        %v733 = vld [vmem:[#allocation4 + $0x70] sm:$0xff]
        %v734 = vld [vmem:[#allocation4 + $0x78] sm:$0xff]
        %vm735 = vcmask 523264
        %v737 = vsel %vm735, %v684, 0
        %v740 = vsel %vm735, %v685, 0
        %v743 = vsel %vm735, %v686, 0
        %v746 = vsel %vm735, %v687, 0
        %v749 = vsel %vm735, %v688, 0
        %v752 = vsel %vm735, %v689, 0
        %v755 = vsel %vm735, %v690, 0
        %v758 = vsel %vm735, %v691, 0
        %v761 = vsel %vm735, %v692, 0
        %v764 = vsel %vm735, %v693, 0
        %v767 = vsel %vm735, %v694, 0
        %v770 = vsel %vm735, %v695, 0
        %v773 = vsel %vm735, %v696, 0
        %v776 = vsel %vm735, %v697, 0
        %v779 = vsel %vm735, %v698, 0
        %v782 = vsel %vm735, %v699, 0
        %v785 = vsel %vm735, %v703, 0
        %v788 = vsel %vm735, %v704, 0
        %v791 = vsel %vm735, %v705, 0
        %v794 = vsel %vm735, %v706, 0
        %v797 = vsel %vm735, %v707, 0
        %v800 = vsel %vm735, %v708, 0
        %v803 = vsel %vm735, %v709, 0
        %v806 = vsel %vm735, %v710, 0
        %v809 = vsel %vm735, %v711, 0
        %v812 = vsel %vm735, %v712, 0
        %v815 = vsel %vm735, %v713, 0
        %v818 = vsel %vm735, %v714, 0
        %v821 = vsel %vm735, %v715, 0
        %v824 = vsel %vm735, %v716, 0
        %v827 = vsel %vm735, %v717, 0
        %v830 = vsel %vm735, %v718, 0
        %832 = vmatprep.subr.mxu0 0.0
        %833 = vmatpush1.xpose.msra.mxu0 %v830
        %834 = vmatprep.subr.mxu0 0.0
        %835 = vmatpush1.xpose.msra.mxu0 %v827
        %836 = vmatprep.subr.mxu0 0.0
        %837 = vmatpush1.xpose.msra.mxu0 %v824
        %838 = vmatprep.subr.mxu0 0.0
        %839 = vmatpush1.xpose.msra.mxu0 %v821
        %840 = vmatprep.subr.mxu0 0.0
        %841 = vmatpush1.xpose.msra.mxu0 %v818
        %842 = vmatprep.subr.mxu0 0.0
        %843 = vmatpush1.xpose.msra.mxu0 %v815
        %844 = vmatprep.subr.mxu0 0.0
        %845 = vmatpush1.xpose.msra.mxu0 %v812
        %846 = vmatprep.subr.mxu0 0.0
        %847 = vmatpush1.xpose.msra.mxu0 %v809
        %848 = vmatprep.subr.mxu0 0.0
        %849 = vmatpush1.xpose.msra.mxu0 %v806
        %850 = vmatprep.subr.mxu0 0.0
        %851 = vmatpush1.xpose.msra.mxu0 %v803
        %852 = vmatprep.subr.mxu0 0.0
        %853 = vmatpush1.xpose.msra.mxu0 %v800
        %854 = vmatprep.subr.mxu0 0.0
        %855 = vmatpush1.xpose.msra.mxu0 %v797
        %856 = vmatprep.subr.mxu0 0.0
        %857 = vmatpush1.xpose.msra.mxu0 %v794
        %858 = vmatprep.subr.mxu0 0.0
        %859 = vmatpush1.xpose.msra.mxu0 %v791
        %860 = vmatprep.subr.mxu0 0.0
        %861 = vmatpush1.xpose.msra.mxu0 %v788
        %862 = vmatprep.subr.mxu0 0.0
        %863 = vmatpush1.xpose.msra.mxu0 %v785
        %864 = vmatprep.subr.mxu0 0.0
        %865 = vmatpush2.xpose.msra.mxu0 0.0
        %866 = vmatprep.subr.mxu0 0.0
        %867 = vmatpush2.xpose.msra.mxu0 0.0
        %868 = vmatprep.subr.mxu0 0.0
        %869 = vmatpush2.xpose.msra.mxu0 0.0
        %870 = vmatprep.subr.mxu0 0.0
        %871 = vmatpush2.xpose.msra.mxu0 0.0
        %872 = vmatprep.subr.mxu0 0.0
        %873 = vmatpush2.xpose.msra.mxu0 0.0
        %874 = vmatprep.subr.mxu0 0.0
        %875 = vmatpush2.xpose.msra.mxu0 0.0
        %876 = vmatprep.subr.mxu0 0.0
        %877 = vmatpush2.xpose.msra.mxu0 0.0
        %878 = vmatprep.subr.mxu0 0.0
        %879 = vmatpush2.xpose.msra.mxu0 0.0
        %880 = vmatprep.subr.mxu0 0.0
        %881 = vmatpush2.xpose.msra.mxu0 0.0
        %882 = vmatprep.subr.mxu0 0.0
        %883 = vmatpush2.xpose.msra.mxu0 0.0
        %884 = vmatprep.subr.mxu0 0.0
        %885 = vmatpush2.xpose.msra.mxu0 0.0
        %886 = vmatprep.subr.mxu0 0.0
        %887 = vmatpush2.xpose.msra.mxu0 0.0
        %888 = vmatprep.subr.mxu0 0.0
        %889 = vmatpush2.xpose.msra.mxu0 0.0
        %890 = vmatprep.subr.mxu0 0.0
        %891 = vmatpush2.xpose.msra.mxu0 0.0
        %892 = vmatprep.subr.mxu0 0.0
        %893 = vmatpush2.xpose.msra.mxu0 0.0
        %894 = vmatprep.subr.mxu0 0.0
        %895 = vmatpush2.xpose.msra.mxu0 0.0
        %896 = vmatprep.mubr.f32.mxu0 0.0
        %897 = vmatmul.mubr.f32.gmra.mxu0 %v737
        %v898 = vpop.f32.mrf.mxu0
        %v899 = vadd.f32 0.0, %v898
        %v900 = vpop.f32.mrf.mxu0
        %901 = vmatprep.mubr.f32.mxu0 0.0
        %902 = vmatmul.mubr.f32.gmra.mxu0 %v740
        %v903 = vpop.f32.mrf.mxu0
        %v904 = vadd.f32 0.0, %v903
        %v905 = vpop.f32.mrf.mxu0
        %906 = vmatprep.mubr.f32.mxu0 0.0
        %907 = vmatmul.mubr.f32.gmra.mxu0 %v743
        %v908 = vpop.f32.mrf.mxu0
        %v909 = vadd.f32 0.0, %v908
        %v910 = vpop.f32.mrf.mxu0
        %911 = vmatprep.mubr.f32.mxu0 0.0
        %912 = vmatmul.mubr.f32.gmra.mxu0 %v746
        %v913 = vpop.f32.mrf.mxu0
        %v914 = vadd.f32 0.0, %v913
        %v915 = vpop.f32.mrf.mxu0
        %916 = vmatprep.mubr.f32.mxu0 0.0
        %917 = vmatmul.mubr.f32.gmra.mxu0 %v749
        %v918 = vpop.f32.mrf.mxu0
        %v919 = vadd.f32 0.0, %v918
        %v920 = vpop.f32.mrf.mxu0
        %921 = vmatprep.mubr.f32.mxu0 0.0
        %922 = vmatmul.mubr.f32.gmra.mxu0 %v752
        %v923 = vpop.f32.mrf.mxu0
        %v924 = vadd.f32 0.0, %v923
        %v925 = vpop.f32.mrf.mxu0
        %926 = vmatprep.mubr.f32.mxu0 0.0
        %927 = vmatmul.mubr.f32.gmra.mxu0 %v755
        %v928 = vpop.f32.mrf.mxu0
        %v929 = vadd.f32 0.0, %v928
        %v930 = vpop.f32.mrf.mxu0
        %931 = vmatprep.mubr.f32.mxu0 0.0
        %932 = vmatmul.mubr.f32.gmra.mxu0 %v758
        %v933 = vpop.f32.mrf.mxu0
        %v934 = vadd.f32 0.0, %v933
        %v935 = vpop.f32.mrf.mxu0
        %936 = vmatprep.mubr.f32.mxu0 0.0
        %937 = vmatmul.mubr.f32.gmra.mxu0 %v761
        %v938 = vpop.f32.mrf.mxu0
        %v939 = vadd.f32 0.0, %v938
        %v940 = vpop.f32.mrf.mxu0
        %941 = vmatprep.mubr.f32.mxu0 0.0
        %942 = vmatmul.mubr.f32.gmra.mxu0 %v764
        %v943 = vpop.f32.mrf.mxu0
        %v944 = vadd.f32 0.0, %v943
        %v945 = vpop.f32.mrf.mxu0
        %946 = vmatprep.mubr.f32.mxu0 0.0
        %947 = vmatmul.mubr.f32.gmra.mxu0 %v767
        %v948 = vpop.f32.mrf.mxu0
        %v949 = vadd.f32 0.0, %v948
        %v950 = vpop.f32.mrf.mxu0
        %951 = vmatprep.mubr.f32.mxu0 0.0
        %952 = vmatmul.mubr.f32.gmra.mxu0 %v770
        %v953 = vpop.f32.mrf.mxu0
        %v954 = vadd.f32 0.0, %v953
        %v955 = vpop.f32.mrf.mxu0
        %956 = vmatprep.mubr.f32.mxu0 0.0
        %957 = vmatmul.mubr.f32.gmra.mxu0 %v773
        %v958 = vpop.f32.mrf.mxu0
        %v959 = vadd.f32 0.0, %v958
        %v960 = vpop.f32.mrf.mxu0
        %961 = vmatprep.mubr.f32.mxu0 0.0
        %962 = vmatmul.mubr.f32.gmra.mxu0 %v776
        %v963 = vpop.f32.mrf.mxu0
        %v964 = vadd.f32 0.0, %v963
        %v965 = vpop.f32.mrf.mxu0
        %966 = vmatprep.mubr.f32.mxu0 0.0
        %967 = vmatmul.mubr.f32.gmra.mxu0 %v779
        %v968 = vpop.f32.mrf.mxu0
        %v969 = vadd.f32 0.0, %v968
        %v970 = vpop.f32.mrf.mxu0
        %971 = vmatprep.mubr.f32.mxu0 0.0
        %972 = vmatmul.mubr.f32.gmra.mxu0 %v782
        %v973 = vpop.f32.mrf.mxu0
        %v974 = vadd.f32 0.0, %v973
        %v975 = vpop.f32.mrf.mxu0
        %976 = vdwg.mxu0
        %v977 = vsel %vm702, %v899, -1e+30
        %v978 = vsel %vm702, %v904, -1e+30
        %v979 = vsel %vm702, %v909, -1e+30
        %v980 = vsel %vm702, %v914, -1e+30
        %v981 = vsel %vm702, %v919, -1e+30
        %v982 = vsel %vm702, %v924, -1e+30
        %v983 = vsel %vm702, %v929, -1e+30
        %v984 = vsel %vm702, %v934, -1e+30
        %v985 = vsel %vm702, %v939, -1e+30
        %v986 = vsel %vm702, %v944, -1e+30
        %v987 = vsel %vm702, %v949, -1e+30
        %v988 = vsel %vm702, %v954, -1e+30
        %v989 = vsel %vm702, %v959, -1e+30
        %v990 = vsel %vm702, %v964, -1e+30
        %v991 = vsel %vm702, %v969, -1e+30
        %v992 = vsel %vm702, %v974, -1e+30
        %993 = vmax.xlane.f32.xlu0 %v977
        %v994 = vpop.xlane.xlu0 %993
        %995 = vmax.xlane.f32.xlu0 %v978
        %v996 = vpop.xlane.xlu0 %995
        %997 = vmax.xlane.f32.xlu0 %v979
        %v998 = vpop.xlane.xlu0 %997
        %999 = vmax.xlane.f32.xlu0 %v980
        %v1000 = vpop.xlane.xlu0 %999
        %1001 = vmax.xlane.f32.xlu0 %v981
        %v1002 = vpop.xlane.xlu0 %1001
        %1003 = vmax.xlane.f32.xlu0 %v982
        %v1004 = vpop.xlane.xlu0 %1003
        %1005 = vmax.xlane.f32.xlu0 %v983
        %v1006 = vpop.xlane.xlu0 %1005
        %1007 = vmax.xlane.f32.xlu0 %v984
        %v1008 = vpop.xlane.xlu0 %1007
        %1009 = vmax.xlane.f32.xlu0 %v985
        %v1010 = vpop.xlane.xlu0 %1009
        %1011 = vmax.xlane.f32.xlu0 %v986
        %v1012 = vpop.xlane.xlu0 %1011
        %1013 = vmax.xlane.f32.xlu0 %v987
        %v1014 = vpop.xlane.xlu0 %1013
        %1015 = vmax.xlane.f32.xlu0 %v988
        %v1016 = vpop.xlane.xlu0 %1015
        %1017 = vmax.xlane.f32.xlu0 %v989
        %v1018 = vpop.xlane.xlu0 %1017
        %1019 = vmax.xlane.f32.xlu0 %v990
        %v1020 = vpop.xlane.xlu0 %1019
        %1021 = vmax.xlane.f32.xlu0 %v991
        %v1022 = vpop.xlane.xlu0 %1021
        %1023 = vmax.xlane.f32.xlu0 %v992
        %v1024 = vpop.xlane.xlu0 %1023
        %v1025 = vsub.f32 %v977, %v994
        %v1026 = vsub.f32 %v978, %v996
        %v1027 = vsub.f32 %v979, %v998
        %v1028 = vsub.f32 %v980, %v1000
        %v1029 = vsub.f32 %v981, %v1002
        %v1030 = vsub.f32 %v982, %v1004
        %v1031 = vsub.f32 %v983, %v1006
        %v1032 = vsub.f32 %v984, %v1008
        %v1033 = vsub.f32 %v985, %v1010
        %v1034 = vsub.f32 %v986, %v1012
        %v1035 = vsub.f32 %v987, %v1014
        %v1036 = vsub.f32 %v988, %v1016
        %v1037 = vsub.f32 %v989, %v1018
        %v1038 = vsub.f32 %v990, %v1020
        %v1039 = vsub.f32 %v991, %v1022
        %v1040 = vsub.f32 %v992, %v1024
        %v1041 = vmul.f32 %v1025, 1.442695
        %v1042 = vpow.pop %v1041
        %v1043 = vmul.f32 %v1026, 1.442695
        %v1044 = vpow.pop %v1043
        %v1045 = vmul.f32 %v1027, 1.442695
        %v1046 = vpow.pop %v1045
        %v1047 = vmul.f32 %v1028, 1.442695
        %v1048 = vpow.pop %v1047
        %v1049 = vmul.f32 %v1029, 1.442695
        %v1050 = vpow.pop %v1049
        %v1051 = vmul.f32 %v1030, 1.442695
        %v1052 = vpow.pop %v1051
        %v1053 = vmul.f32 %v1031, 1.442695
        %v1054 = vpow.pop %v1053
        %v1055 = vmul.f32 %v1032, 1.442695
        %v1056 = vpow.pop %v1055
        %v1057 = vmul.f32 %v1033, 1.442695
        %v1058 = vpow.pop %v1057
        %v1059 = vmul.f32 %v1034, 1.442695
        %v1060 = vpow.pop %v1059
        %v1061 = vmul.f32 %v1035, 1.442695
        %v1062 = vpow.pop %v1061
        %v1063 = vmul.f32 %v1036, 1.442695
        %v1064 = vpow.pop %v1063
        %v1065 = vmul.f32 %v1037, 1.442695
        %v1066 = vpow.pop %v1065
        %v1067 = vmul.f32 %v1038, 1.442695
        %v1068 = vpow.pop %v1067
        %v1069 = vmul.f32 %v1039, 1.442695
        %v1070 = vpow.pop %v1069
        %v1071 = vmul.f32 %v1040, 1.442695
        %v1072 = vpow.pop %v1071
        %1073 = vadd.xlane.f32.xlu0 %v1042
        %v1074 = vpop.xlane.xlu0 %1073
        %1075 = vadd.xlane.f32.xlu0 %v1044
        %v1076 = vpop.xlane.xlu0 %1075
        %1077 = vadd.xlane.f32.xlu0 %v1046
        %v1078 = vpop.xlane.xlu0 %1077
        %1079 = vadd.xlane.f32.xlu0 %v1048
        %v1080 = vpop.xlane.xlu0 %1079
        %1081 = vadd.xlane.f32.xlu0 %v1050
        %v1082 = vpop.xlane.xlu0 %1081
        %1083 = vadd.xlane.f32.xlu0 %v1052
        %v1084 = vpop.xlane.xlu0 %1083
        %1085 = vadd.xlane.f32.xlu0 %v1054
        %v1086 = vpop.xlane.xlu0 %1085
        %1087 = vadd.xlane.f32.xlu0 %v1056
        %v1088 = vpop.xlane.xlu0 %1087
        %1089 = vadd.xlane.f32.xlu0 %v1058
        %v1090 = vpop.xlane.xlu0 %1089
        %1091 = vadd.xlane.f32.xlu0 %v1060
        %v1092 = vpop.xlane.xlu0 %1091
        %1093 = vadd.xlane.f32.xlu0 %v1062
        %v1094 = vpop.xlane.xlu0 %1093
        %1095 = vadd.xlane.f32.xlu0 %v1064
        %v1096 = vpop.xlane.xlu0 %1095
        %1097 = vadd.xlane.f32.xlu0 %v1066
        %v1098 = vpop.xlane.xlu0 %1097
        %1099 = vadd.xlane.f32.xlu0 %v1068
        %v1100 = vpop.xlane.xlu0 %1099
        %1101 = vadd.xlane.f32.xlu0 %v1070
        %v1102 = vpop.xlane.xlu0 %1101
        %1103 = vadd.xlane.f32.xlu0 %v1072
        %v1104 = vpop.xlane.xlu0 %1103
        %v1105 = vrcp.pop %v1074
        %v1106 = vmul.f32 %v1042, %v1105
        %v1107 = vrcp.pop %v1076
        %v1108 = vmul.f32 %v1044, %v1107
        %v1109 = vrcp.pop %v1078
        %v1110 = vmul.f32 %v1046, %v1109
        %v1111 = vrcp.pop %v1080
        %v1112 = vmul.f32 %v1048, %v1111
        %v1113 = vrcp.pop %v1082
        %v1114 = vmul.f32 %v1050, %v1113
        %v1115 = vrcp.pop %v1084
        %v1116 = vmul.f32 %v1052, %v1115
        %v1117 = vrcp.pop %v1086
        %v1118 = vmul.f32 %v1054, %v1117
        %v1119 = vrcp.pop %v1088
        %v1120 = vmul.f32 %v1056, %v1119
        %v1121 = vrcp.pop %v1090
        %v1122 = vmul.f32 %v1058, %v1121
        %v1123 = vrcp.pop %v1092
        %v1124 = vmul.f32 %v1060, %v1123
        %v1125 = vrcp.pop %v1094
        %v1126 = vmul.f32 %v1062, %v1125
        %v1127 = vrcp.pop %v1096
        %v1128 = vmul.f32 %v1064, %v1127
        %v1129 = vrcp.pop %v1098
        %v1130 = vmul.f32 %v1066, %v1129
        %v1131 = vrcp.pop %v1100
        %v1132 = vmul.f32 %v1068, %v1131
        %v1133 = vrcp.pop %v1102
        %v1134 = vmul.f32 %v1070, %v1133
        %v1135 = vrcp.pop %v1104
        %v1136 = vmul.f32 %v1072, %v1135
        %1137 = vmatprep.subr.mxu0 0.0
        %1138 = vmatpush1.msra.mxu0 %v734
        %1139 = vmatprep.subr.mxu0 0.0
        %1140 = vmatpush1.msra.mxu0 %v733
        %1141 = vmatprep.subr.mxu0 0.0
        %1142 = vmatpush1.msra.mxu0 %v732
        %1143 = vmatprep.subr.mxu0 0.0
        %1144 = vmatpush1.msra.mxu0 %v731
        %1145 = vmatprep.subr.mxu0 0.0
        %1146 = vmatpush1.msra.mxu0 %v730
        %1147 = vmatprep.subr.mxu0 0.0
        %1148 = vmatpush1.msra.mxu0 %v729
        %1149 = vmatprep.subr.mxu0 0.0
        %1150 = vmatpush1.msra.mxu0 %v728
        %1151 = vmatprep.subr.mxu0 0.0
        %1152 = vmatpush1.msra.mxu0 %v727
        %1153 = vmatprep.subr.mxu0 0.0
        %1154 = vmatpush1.msra.mxu0 %v726
        %1155 = vmatprep.subr.mxu0 0.0
        %1156 = vmatpush1.msra.mxu0 %v725
        %1157 = vmatprep.subr.mxu0 0.0
        %1158 = vmatpush1.msra.mxu0 %v724
        %1159 = vmatprep.subr.mxu0 0.0
        %1160 = vmatpush1.msra.mxu0 %v723
        %1161 = vmatprep.subr.mxu0 0.0
        %1162 = vmatpush1.msra.mxu0 %v722
        %1163 = vmatprep.subr.mxu0 0.0
        %1164 = vmatpush1.msra.mxu0 %v721
        %1165 = vmatprep.subr.mxu0 0.0
        %1166 = vmatpush1.msra.mxu0 %v720
        %1167 = vmatprep.subr.mxu0 0.0
        %1168 = vmatpush1.msra.mxu0 %v719
        %1169 = vmatprep.subr.mxu0 0.0
        %1170 = vmatpush2.msra.mxu0 0.0
        %1171 = vmatprep.subr.mxu0 0.0
        %1172 = vmatpush2.msra.mxu0 0.0
        %1173 = vmatprep.subr.mxu0 0.0
        %1174 = vmatpush2.msra.mxu0 0.0
        %1175 = vmatprep.subr.mxu0 0.0
        %1176 = vmatpush2.msra.mxu0 0.0
        %1177 = vmatprep.subr.mxu0 0.0
        %1178 = vmatpush2.msra.mxu0 0.0
        %1179 = vmatprep.subr.mxu0 0.0
        %1180 = vmatpush2.msra.mxu0 0.0
        %1181 = vmatprep.subr.mxu0 0.0
        %1182 = vmatpush2.msra.mxu0 0.0
        %1183 = vmatprep.subr.mxu0 0.0
        %1184 = vmatpush2.msra.mxu0 0.0
        %1185 = vmatprep.subr.mxu0 0.0
        %1186 = vmatpush2.msra.mxu0 0.0
        %1187 = vmatprep.subr.mxu0 0.0
        %1188 = vmatpush2.msra.mxu0 0.0
        %1189 = vmatprep.subr.mxu0 0.0
        %1190 = vmatpush2.msra.mxu0 0.0
        %1191 = vmatprep.subr.mxu0 0.0
        %1192 = vmatpush2.msra.mxu0 0.0
        %1193 = vmatprep.subr.mxu0 0.0
        %1194 = vmatpush2.msra.mxu0 0.0
        %1195 = vmatprep.subr.mxu0 0.0
        %1196 = vmatpush2.msra.mxu0 0.0
        %1197 = vmatprep.subr.mxu0 0.0
        %1198 = vmatpush2.msra.mxu0 0.0
        %1199 = vmatprep.subr.mxu0 0.0
        %1200 = vmatpush2.msra.mxu0 0.0
        %1201 = vmatprep.mubr.f32.mxu0 0.0
        %1202 = vmatmul.mubr.f32.gmra.mxu0 %v1106
        %v1203 = vpop.f32.mrf.mxu0
        %v1204 = vadd.f32 0.0, %v1203
        %v1205 = vpop.f32.mrf.mxu0
        %1206 = vmatprep.mubr.f32.mxu0 0.0
        %1207 = vmatmul.mubr.f32.gmra.mxu0 %v1108
        %v1208 = vpop.f32.mrf.mxu0
        %v1209 = vadd.f32 0.0, %v1208
        %v1210 = vpop.f32.mrf.mxu0
        %1211 = vmatprep.mubr.f32.mxu0 0.0
        %1212 = vmatmul.mubr.f32.gmra.mxu0 %v1110
        %v1213 = vpop.f32.mrf.mxu0
        %v1214 = vadd.f32 0.0, %v1213
        %v1215 = vpop.f32.mrf.mxu0
        %1216 = vmatprep.mubr.f32.mxu0 0.0
        %1217 = vmatmul.mubr.f32.gmra.mxu0 %v1112
        %v1218 = vpop.f32.mrf.mxu0
        %v1219 = vadd.f32 0.0, %v1218
        %v1220 = vpop.f32.mrf.mxu0
        %1221 = vmatprep.mubr.f32.mxu0 0.0
        %1222 = vmatmul.mubr.f32.gmra.mxu0 %v1114
        %v1223 = vpop.f32.mrf.mxu0
        %v1224 = vadd.f32 0.0, %v1223
        %v1225 = vpop.f32.mrf.mxu0
        %1226 = vmatprep.mubr.f32.mxu0 0.0
        %1227 = vmatmul.mubr.f32.gmra.mxu0 %v1116
        %v1228 = vpop.f32.mrf.mxu0
        %v1229 = vadd.f32 0.0, %v1228
        %v1230 = vpop.f32.mrf.mxu0
        %1231 = vmatprep.mubr.f32.mxu0 0.0
        %1232 = vmatmul.mubr.f32.gmra.mxu0 %v1118
        %v1233 = vpop.f32.mrf.mxu0
        %v1234 = vadd.f32 0.0, %v1233
        %v1235 = vpop.f32.mrf.mxu0
        %1236 = vmatprep.mubr.f32.mxu0 0.0
        %1237 = vmatmul.mubr.f32.gmra.mxu0 %v1120
        %v1238 = vpop.f32.mrf.mxu0
        %v1239 = vadd.f32 0.0, %v1238
        %v1240 = vpop.f32.mrf.mxu0
        %1241 = vmatprep.mubr.f32.mxu0 0.0
        %1242 = vmatmul.mubr.f32.gmra.mxu0 %v1122
        %v1243 = vpop.f32.mrf.mxu0
        %v1244 = vadd.f32 0.0, %v1243
        %v1245 = vpop.f32.mrf.mxu0
        %1246 = vmatprep.mubr.f32.mxu0 0.0
        %1247 = vmatmul.mubr.f32.gmra.mxu0 %v1124
        %v1248 = vpop.f32.mrf.mxu0
        %v1249 = vadd.f32 0.0, %v1248
        %v1250 = vpop.f32.mrf.mxu0
        %1251 = vmatprep.mubr.f32.mxu0 0.0
        %1252 = vmatmul.mubr.f32.gmra.mxu0 %v1126
        %v1253 = vpop.f32.mrf.mxu0
        %v1254 = vadd.f32 0.0, %v1253
        %v1255 = vpop.f32.mrf.mxu0
        %1256 = vmatprep.mubr.f32.mxu0 0.0
        %1257 = vmatmul.mubr.f32.gmra.mxu0 %v1128
        %v1258 = vpop.f32.mrf.mxu0
        %v1259 = vadd.f32 0.0, %v1258
        %v1260 = vpop.f32.mrf.mxu0
        %1261 = vmatprep.mubr.f32.mxu0 0.0
        %1262 = vmatmul.mubr.f32.gmra.mxu0 %v1130
        %v1263 = vpop.f32.mrf.mxu0
        %v1264 = vadd.f32 0.0, %v1263
        %v1265 = vpop.f32.mrf.mxu0
        %1266 = vmatprep.mubr.f32.mxu0 0.0
        %1267 = vmatmul.mubr.f32.gmra.mxu0 %v1132
        %v1268 = vpop.f32.mrf.mxu0
        %v1269 = vadd.f32 0.0, %v1268
        %v1270 = vpop.f32.mrf.mxu0
        %1271 = vmatprep.mubr.f32.mxu0 0.0
        %1272 = vmatmul.mubr.f32.gmra.mxu0 %v1134
        %v1273 = vpop.f32.mrf.mxu0
        %v1274 = vadd.f32 0.0, %v1273
        %v1275 = vpop.f32.mrf.mxu0
        %1276 = vmatprep.mubr.f32.mxu0 0.0
        %1277 = vmatmul.mubr.f32.gmra.mxu0 %v1136
        %v1278 = vpop.f32.mrf.mxu0
        %v1279 = vadd.f32 0.0, %v1278
        %v1280 = vpop.f32.mrf.mxu0
        %1281 = vdwg.mxu0
        %1282 = vst.msk [vmem:[#allocation5] sm:$0xff] %vm735, %v1204
        %1283 = vst.msk [vmem:[#allocation5 + $0x8] sm:$0xff] %vm735, %v1209
        %1284 = vst.msk [vmem:[#allocation5 + $0x10] sm:$0xff] %vm735, %v1214
        %1285 = vst.msk [vmem:[#allocation5 + $0x18] sm:$0xff] %vm735, %v1219
        %1286 = vst.msk [vmem:[#allocation5 + $0x20] sm:$0xff] %vm735, %v1224
        %1287 = vst.msk [vmem:[#allocation5 + $0x28] sm:$0xff] %vm735, %v1229
        %1288 = vst.msk [vmem:[#allocation5 + $0x30] sm:$0xff] %vm735, %v1234
        %1289 = vst.msk [vmem:[#allocation5 + $0x38] sm:$0xff] %vm735, %v1239
        %1290 = vst.msk [vmem:[#allocation5 + $0x40] sm:$0xff] %vm735, %v1244
        %1291 = vst.msk [vmem:[#allocation5 + $0x48] sm:$0xff] %vm735, %v1249
        %1292 = vst.msk [vmem:[#allocation5 + $0x50] sm:$0xff] %vm735, %v1254
        %1293 = vst.msk [vmem:[#allocation5 + $0x58] sm:$0xff] %vm735, %v1259
        %1294 = vst.msk [vmem:[#allocation5 + $0x60] sm:$0xff] %vm735, %v1264
        %1295 = vst.msk [vmem:[#allocation5 + $0x68] sm:$0xff] %vm735, %v1269
        %1296 = vst.msk [vmem:[#allocation5 + $0x70] sm:$0xff] %vm735, %v1274
        %1297 = vst.msk [vmem:[#allocation5 + $0x78] sm:$0xff] %vm735, %v1279
        %v1298 = vld [vmem:[#allocation3] sm:$0xff]
        %v1299 = vld [vmem:[#allocation3 + $0x8] sm:$0xff]
        %v1300 = vld [vmem:[#allocation3 + $0x10] sm:$0xff]
        %v1301 = vld [vmem:[#allocation3 + $0x18] sm:$0xff]
        %v1302 = vld [vmem:[#allocation3 + $0x20] sm:$0xff]
        %v1303 = vld [vmem:[#allocation3 + $0x28] sm:$0xff]
        %v1304 = vld [vmem:[#allocation3 + $0x30] sm:$0xff]
        %v1305 = vld [vmem:[#allocation3 + $0x38] sm:$0xff]
        %v1306 = vld [vmem:[#allocation3 + $0x40] sm:$0xff]
        %v1307 = vld [vmem:[#allocation3 + $0x48] sm:$0xff]
        %v1308 = vld [vmem:[#allocation3 + $0x50] sm:$0xff]
        %v1309 = vld [vmem:[#allocation3 + $0x58] sm:$0xff]
        %v1310 = vld [vmem:[#allocation3 + $0x60] sm:$0xff]
        %v1311 = vld [vmem:[#allocation3 + $0x68] sm:$0xff]
        %v1312 = vld [vmem:[#allocation3 + $0x70] sm:$0xff]
        %v1313 = vld [vmem:[#allocation3 + $0x78] sm:$0xff]
        %v1314 = vld [vmem:[#allocation4] sm:$0xff]
        %v1315 = vld [vmem:[#allocation4 + $0x8] sm:$0xff]
        %v1316 = vld [vmem:[#allocation4 + $0x10] sm:$0xff]
        %v1317 = vld [vmem:[#allocation4 + $0x18] sm:$0xff]
        %v1318 = vld [vmem:[#allocation4 + $0x20] sm:$0xff]
        %v1319 = vld [vmem:[#allocation4 + $0x28] sm:$0xff]
        %v1320 = vld [vmem:[#allocation4 + $0x30] sm:$0xff]
        %v1321 = vld [vmem:[#allocation4 + $0x38] sm:$0xff]
        %v1322 = vld [vmem:[#allocation4 + $0x40] sm:$0xff]
        %v1323 = vld [vmem:[#allocation4 + $0x48] sm:$0xff]
        %v1324 = vld [vmem:[#allocation4 + $0x50] sm:$0xff]
        %v1325 = vld [vmem:[#allocation4 + $0x58] sm:$0xff]
        %v1326 = vld [vmem:[#allocation4 + $0x60] sm:$0xff]
        %v1327 = vld [vmem:[#allocation4 + $0x68] sm:$0xff]
        %v1328 = vld [vmem:[#allocation4 + $0x70] sm:$0xff]
        %v1329 = vld [vmem:[#allocation4 + $0x78] sm:$0xff]
        %1330 = vrot.lane.b32.xlu0 %v684, 64
        %v1331 = vpop.permute.xlu0 %1330
        %1332 = vrot.lane.b32.xlu0 %v685, 64
        %v1333 = vpop.permute.xlu0 %1332
        %1334 = vrot.lane.b32.xlu0 %v686, 64
        %v1335 = vpop.permute.xlu0 %1334
        %1336 = vrot.lane.b32.xlu0 %v687, 64
        %v1337 = vpop.permute.xlu0 %1336
        %1338 = vrot.lane.b32.xlu0 %v688, 64
        %v1339 = vpop.permute.xlu0 %1338
        %1340 = vrot.lane.b32.xlu0 %v689, 64
        %v1341 = vpop.permute.xlu0 %1340
        %1342 = vrot.lane.b32.xlu0 %v690, 64
        %v1343 = vpop.permute.xlu0 %1342
        %1344 = vrot.lane.b32.xlu0 %v691, 64
        %v1345 = vpop.permute.xlu0 %1344
        %1346 = vrot.lane.b32.xlu0 %v692, 64
        %v1347 = vpop.permute.xlu0 %1346
        %1348 = vrot.lane.b32.xlu0 %v693, 64
        %v1349 = vpop.permute.xlu0 %1348
        %1350 = vrot.lane.b32.xlu0 %v694, 64
        %v1351 = vpop.permute.xlu0 %1350
        %1352 = vrot.lane.b32.xlu0 %v695, 64
        %v1353 = vpop.permute.xlu0 %1352
        %1354 = vrot.lane.b32.xlu0 %v696, 64
        %v1355 = vpop.permute.xlu0 %1354
        %1356 = vrot.lane.b32.xlu0 %v697, 64
        %v1357 = vpop.permute.xlu0 %1356
        %1358 = vrot.lane.b32.xlu0 %v698, 64
        %v1359 = vpop.permute.xlu0 %1358
        %1360 = vrot.lane.b32.xlu0 %v699, 64
        %v1361 = vpop.permute.xlu0 %1360
        %1378 = vrot.lane.b32.xlu0 %v1298, 64
        %v1379 = vpop.permute.xlu0 %1378
        %1380 = vrot.lane.b32.xlu0 %v1299, 64
        %v1381 = vpop.permute.xlu0 %1380
        %1382 = vrot.lane.b32.xlu0 %v1300, 64
        %v1383 = vpop.permute.xlu0 %1382
        %1384 = vrot.lane.b32.xlu0 %v1301, 64
        %v1385 = vpop.permute.xlu0 %1384
        %1386 = vrot.lane.b32.xlu0 %v1302, 64
        %v1387 = vpop.permute.xlu0 %1386
        %1388 = vrot.lane.b32.xlu0 %v1303, 64
        %v1389 = vpop.permute.xlu0 %1388
        %1390 = vrot.lane.b32.xlu0 %v1304, 64
        %v1391 = vpop.permute.xlu0 %1390
        %1392 = vrot.lane.b32.xlu0 %v1305, 64
        %v1393 = vpop.permute.xlu0 %1392
        %1394 = vrot.lane.b32.xlu0 %v1306, 64
        %v1395 = vpop.permute.xlu0 %1394
        %1396 = vrot.lane.b32.xlu0 %v1307, 64
        %v1397 = vpop.permute.xlu0 %1396
        %1398 = vrot.lane.b32.xlu0 %v1308, 64
        %v1399 = vpop.permute.xlu0 %1398
        %1400 = vrot.lane.b32.xlu0 %v1309, 64
        %v1401 = vpop.permute.xlu0 %1400
        %1402 = vrot.lane.b32.xlu0 %v1310, 64
        %v1403 = vpop.permute.xlu0 %1402
        %1404 = vrot.lane.b32.xlu0 %v1311, 64
        %v1405 = vpop.permute.xlu0 %1404
        %1406 = vrot.lane.b32.xlu0 %v1312, 64
        %v1407 = vpop.permute.xlu0 %1406
        %1408 = vrot.lane.b32.xlu0 %v1313, 64
        %v1409 = vpop.permute.xlu0 %1408
        %v1410 = vsel %vm735, %v1331, 0
        %v1412 = vsel %vm735, %v1333, 0
        %v1414 = vsel %vm735, %v1335, 0
        %v1416 = vsel %vm735, %v1337, 0
        %v1418 = vsel %vm735, %v1339, 0
        %v1420 = vsel %vm735, %v1341, 0
        %v1422 = vsel %vm735, %v1343, 0
        %v1424 = vsel %vm735, %v1345, 0
        %v1426 = vsel %vm735, %v1347, 0
        %v1428 = vsel %vm735, %v1349, 0
        %v1430 = vsel %vm735, %v1351, 0
        %v1432 = vsel %vm735, %v1353, 0
        %v1434 = vsel %vm735, %v1355, 0
        %v1436 = vsel %vm735, %v1357, 0
        %v1438 = vsel %vm735, %v1359, 0
        %v1440 = vsel %vm735, %v1361, 0
        %v1442 = vsel %vm735, %v1379, 0
        %v1444 = vsel %vm735, %v1381, 0
        %v1446 = vsel %vm735, %v1383, 0
        %v1448 = vsel %vm735, %v1385, 0
        %v1450 = vsel %vm735, %v1387, 0
        %v1452 = vsel %vm735, %v1389, 0
        %v1454 = vsel %vm735, %v1391, 0
        %v1456 = vsel %vm735, %v1393, 0
        %v1458 = vsel %vm735, %v1395, 0
        %v1460 = vsel %vm735, %v1397, 0
        %v1462 = vsel %vm735, %v1399, 0
        %v1464 = vsel %vm735, %v1401, 0
        %v1466 = vsel %vm735, %v1403, 0
        %v1468 = vsel %vm735, %v1405, 0
        %v1470 = vsel %vm735, %v1407, 0
        %v1472 = vsel %vm735, %v1409, 0
        %1474 = vmatprep.subr.mxu0 0.0
        %1475 = vmatpush1.xpose.msra.mxu0 %v1472
        %1476 = vmatprep.subr.mxu0 0.0
        %1477 = vmatpush1.xpose.msra.mxu0 %v1470
        %1478 = vmatprep.subr.mxu0 0.0
        %1479 = vmatpush1.xpose.msra.mxu0 %v1468
        %1480 = vmatprep.subr.mxu0 0.0
        %1481 = vmatpush1.xpose.msra.mxu0 %v1466
        %1482 = vmatprep.subr.mxu0 0.0
        %1483 = vmatpush1.xpose.msra.mxu0 %v1464
        %1484 = vmatprep.subr.mxu0 0.0
        %1485 = vmatpush1.xpose.msra.mxu0 %v1462
        %1486 = vmatprep.subr.mxu0 0.0
        %1487 = vmatpush1.xpose.msra.mxu0 %v1460
        %1488 = vmatprep.subr.mxu0 0.0
        %1489 = vmatpush1.xpose.msra.mxu0 %v1458
        %1490 = vmatprep.subr.mxu0 0.0
        %1491 = vmatpush1.xpose.msra.mxu0 %v1456
        %1492 = vmatprep.subr.mxu0 0.0
        %1493 = vmatpush1.xpose.msra.mxu0 %v1454
        %1494 = vmatprep.subr.mxu0 0.0
        %1495 = vmatpush1.xpose.msra.mxu0 %v1452
        %1496 = vmatprep.subr.mxu0 0.0
        %1497 = vmatpush1.xpose.msra.mxu0 %v1450
        %1498 = vmatprep.subr.mxu0 0.0
        %1499 = vmatpush1.xpose.msra.mxu0 %v1448
        %1500 = vmatprep.subr.mxu0 0.0
        %1501 = vmatpush1.xpose.msra.mxu0 %v1446
        %1502 = vmatprep.subr.mxu0 0.0
        %1503 = vmatpush1.xpose.msra.mxu0 %v1444
        %1504 = vmatprep.subr.mxu0 0.0
        %1505 = vmatpush1.xpose.msra.mxu0 %v1442
        %1506 = vmatprep.subr.mxu0 0.0
        %1507 = vmatpush2.xpose.msra.mxu0 0.0
        %1508 = vmatprep.subr.mxu0 0.0
        %1509 = vmatpush2.xpose.msra.mxu0 0.0
        %1510 = vmatprep.subr.mxu0 0.0
        %1511 = vmatpush2.xpose.msra.mxu0 0.0
        %1512 = vmatprep.subr.mxu0 0.0
        %1513 = vmatpush2.xpose.msra.mxu0 0.0
        %1514 = vmatprep.subr.mxu0 0.0
        %1515 = vmatpush2.xpose.msra.mxu0 0.0
        %1516 = vmatprep.subr.mxu0 0.0
        %1517 = vmatpush2.xpose.msra.mxu0 0.0
        %1518 = vmatprep.subr.mxu0 0.0
        %1519 = vmatpush2.xpose.msra.mxu0 0.0
        %1520 = vmatprep.subr.mxu0 0.0
        %1521 = vmatpush2.xpose.msra.mxu0 0.0
        %1522 = vmatprep.subr.mxu0 0.0
        %1523 = vmatpush2.xpose.msra.mxu0 0.0
        %1524 = vmatprep.subr.mxu0 0.0
        %1525 = vmatpush2.xpose.msra.mxu0 0.0
        %1526 = vmatprep.subr.mxu0 0.0
        %1527 = vmatpush2.xpose.msra.mxu0 0.0
        %1528 = vmatprep.subr.mxu0 0.0
        %1529 = vmatpush2.xpose.msra.mxu0 0.0
        %1530 = vmatprep.subr.mxu0 0.0
        %1531 = vmatpush2.xpose.msra.mxu0 0.0
        %1532 = vmatprep.subr.mxu0 0.0
        %1533 = vmatpush2.xpose.msra.mxu0 0.0
        %1534 = vmatprep.subr.mxu0 0.0
        %1535 = vmatpush2.xpose.msra.mxu0 0.0
        %1536 = vmatprep.subr.mxu0 0.0
        %1537 = vmatpush2.xpose.msra.mxu0 0.0
        %1538 = vmatprep.mubr.f32.mxu0 0.0
        %1539 = vmatmul.mubr.f32.gmra.mxu0 %v1410
        %v1540 = vpop.f32.mrf.mxu0
        %v1541 = vadd.f32 0.0, %v1540
        %v1542 = vpop.f32.mrf.mxu0
        %1543 = vmatprep.mubr.f32.mxu0 0.0
        %1544 = vmatmul.mubr.f32.gmra.mxu0 %v1412
        %v1545 = vpop.f32.mrf.mxu0
        %v1546 = vadd.f32 0.0, %v1545
        %v1547 = vpop.f32.mrf.mxu0
        %1548 = vmatprep.mubr.f32.mxu0 0.0
        %1549 = vmatmul.mubr.f32.gmra.mxu0 %v1414
        %v1550 = vpop.f32.mrf.mxu0
        %v1551 = vadd.f32 0.0, %v1550
        %v1552 = vpop.f32.mrf.mxu0
        %1553 = vmatprep.mubr.f32.mxu0 0.0
        %1554 = vmatmul.mubr.f32.gmra.mxu0 %v1416
        %v1555 = vpop.f32.mrf.mxu0
        %v1556 = vadd.f32 0.0, %v1555
        %v1557 = vpop.f32.mrf.mxu0
        %1558 = vmatprep.mubr.f32.mxu0 0.0
        %1559 = vmatmul.mubr.f32.gmra.mxu0 %v1418
        %v1560 = vpop.f32.mrf.mxu0
        %v1561 = vadd.f32 0.0, %v1560
        %v1562 = vpop.f32.mrf.mxu0
        %1563 = vmatprep.mubr.f32.mxu0 0.0
        %1564 = vmatmul.mubr.f32.gmra.mxu0 %v1420
        %v1565 = vpop.f32.mrf.mxu0
        %v1566 = vadd.f32 0.0, %v1565
        %v1567 = vpop.f32.mrf.mxu0
        %1568 = vmatprep.mubr.f32.mxu0 0.0
        %1569 = vmatmul.mubr.f32.gmra.mxu0 %v1422
        %v1570 = vpop.f32.mrf.mxu0
        %v1571 = vadd.f32 0.0, %v1570
        %v1572 = vpop.f32.mrf.mxu0
        %1573 = vmatprep.mubr.f32.mxu0 0.0
        %1574 = vmatmul.mubr.f32.gmra.mxu0 %v1424
        %v1575 = vpop.f32.mrf.mxu0
        %v1576 = vadd.f32 0.0, %v1575
        %v1577 = vpop.f32.mrf.mxu0
        %1578 = vmatprep.mubr.f32.mxu0 0.0
        %1579 = vmatmul.mubr.f32.gmra.mxu0 %v1426
        %v1580 = vpop.f32.mrf.mxu0
        %v1581 = vadd.f32 0.0, %v1580
        %v1582 = vpop.f32.mrf.mxu0
        %1583 = vmatprep.mubr.f32.mxu0 0.0
        %1584 = vmatmul.mubr.f32.gmra.mxu0 %v1428
        %v1585 = vpop.f32.mrf.mxu0
        %v1586 = vadd.f32 0.0, %v1585
        %v1587 = vpop.f32.mrf.mxu0
        %1588 = vmatprep.mubr.f32.mxu0 0.0
        %1589 = vmatmul.mubr.f32.gmra.mxu0 %v1430
        %v1590 = vpop.f32.mrf.mxu0
        %v1591 = vadd.f32 0.0, %v1590
        %v1592 = vpop.f32.mrf.mxu0
        %1593 = vmatprep.mubr.f32.mxu0 0.0
        %1594 = vmatmul.mubr.f32.gmra.mxu0 %v1432
        %v1595 = vpop.f32.mrf.mxu0
        %v1596 = vadd.f32 0.0, %v1595
        %v1597 = vpop.f32.mrf.mxu0
        %1598 = vmatprep.mubr.f32.mxu0 0.0
        %1599 = vmatmul.mubr.f32.gmra.mxu0 %v1434
        %v1600 = vpop.f32.mrf.mxu0
        %v1601 = vadd.f32 0.0, %v1600
        %v1602 = vpop.f32.mrf.mxu0
        %1603 = vmatprep.mubr.f32.mxu0 0.0
        %1604 = vmatmul.mubr.f32.gmra.mxu0 %v1436
        %v1605 = vpop.f32.mrf.mxu0
        %v1606 = vadd.f32 0.0, %v1605
        %v1607 = vpop.f32.mrf.mxu0
        %1608 = vmatprep.mubr.f32.mxu0 0.0
        %1609 = vmatmul.mubr.f32.gmra.mxu0 %v1438
        %v1610 = vpop.f32.mrf.mxu0
        %v1611 = vadd.f32 0.0, %v1610
        %v1612 = vpop.f32.mrf.mxu0
        %1613 = vmatprep.mubr.f32.mxu0 0.0
        %1614 = vmatmul.mubr.f32.gmra.mxu0 %v1440
        %v1615 = vpop.f32.mrf.mxu0
        %v1616 = vadd.f32 0.0, %v1615
        %v1617 = vpop.f32.mrf.mxu0
        %1618 = vdwg.mxu0
        %v1619 = vsel %vm702, %v1541, -1e+30
        %v1620 = vsel %vm702, %v1546, -1e+30
        %v1621 = vsel %vm702, %v1551, -1e+30
        %v1622 = vsel %vm702, %v1556, -1e+30
        %v1623 = vsel %vm702, %v1561, -1e+30
        %v1624 = vsel %vm702, %v1566, -1e+30
        %v1625 = vsel %vm702, %v1571, -1e+30
        %v1626 = vsel %vm702, %v1576, -1e+30
        %v1627 = vsel %vm702, %v1581, -1e+30
        %v1628 = vsel %vm702, %v1586, -1e+30
        %v1629 = vsel %vm702, %v1591, -1e+30
        %v1630 = vsel %vm702, %v1596, -1e+30
        %v1631 = vsel %vm702, %v1601, -1e+30
        %v1632 = vsel %vm702, %v1606, -1e+30
        %v1633 = vsel %vm702, %v1611, -1e+30
        %v1634 = vsel %vm702, %v1616, -1e+30
        %1635 = vmax.xlane.f32.xlu0 %v1619
        %v1636 = vpop.xlane.xlu0 %1635
        %1637 = vmax.xlane.f32.xlu0 %v1620
        %v1638 = vpop.xlane.xlu0 %1637
        %1639 = vmax.xlane.f32.xlu0 %v1621
        %v1640 = vpop.xlane.xlu0 %1639
        %1641 = vmax.xlane.f32.xlu0 %v1622
        %v1642 = vpop.xlane.xlu0 %1641
        %1643 = vmax.xlane.f32.xlu0 %v1623
        %v1644 = vpop.xlane.xlu0 %1643
        %1645 = vmax.xlane.f32.xlu0 %v1624
        %v1646 = vpop.xlane.xlu0 %1645
        %1647 = vmax.xlane.f32.xlu0 %v1625
        %v1648 = vpop.xlane.xlu0 %1647
        %1649 = vmax.xlane.f32.xlu0 %v1626
        %v1650 = vpop.xlane.xlu0 %1649
        %1651 = vmax.xlane.f32.xlu0 %v1627
        %v1652 = vpop.xlane.xlu0 %1651
        %1653 = vmax.xlane.f32.xlu0 %v1628
        %v1654 = vpop.xlane.xlu0 %1653
        %1655 = vmax.xlane.f32.xlu0 %v1629
        %v1656 = vpop.xlane.xlu0 %1655
        %1657 = vmax.xlane.f32.xlu0 %v1630
        %v1658 = vpop.xlane.xlu0 %1657
        %1659 = vmax.xlane.f32.xlu0 %v1631
        %v1660 = vpop.xlane.xlu0 %1659
        %1661 = vmax.xlane.f32.xlu0 %v1632
        %v1662 = vpop.xlane.xlu0 %1661
        %1663 = vmax.xlane.f32.xlu0 %v1633
        %v1664 = vpop.xlane.xlu0 %1663
        %1665 = vmax.xlane.f32.xlu0 %v1634
        %v1666 = vpop.xlane.xlu0 %1665
        %v1667 = vsub.f32 %v1619, %v1636
        %v1668 = vsub.f32 %v1620, %v1638
        %v1669 = vsub.f32 %v1621, %v1640
        %v1670 = vsub.f32 %v1622, %v1642
        %v1671 = vsub.f32 %v1623, %v1644
        %v1672 = vsub.f32 %v1624, %v1646
        %v1673 = vsub.f32 %v1625, %v1648
        %v1674 = vsub.f32 %v1626, %v1650
        %v1675 = vsub.f32 %v1627, %v1652
        %v1676 = vsub.f32 %v1628, %v1654
        %v1677 = vsub.f32 %v1629, %v1656
        %v1678 = vsub.f32 %v1630, %v1658
        %v1679 = vsub.f32 %v1631, %v1660
        %v1680 = vsub.f32 %v1632, %v1662
        %v1681 = vsub.f32 %v1633, %v1664
        %v1682 = vsub.f32 %v1634, %v1666
        %v1683 = vmul.f32 %v1667, 1.442695
        %v1684 = vpow.pop %v1683
        %v1685 = vmul.f32 %v1668, 1.442695
        %v1686 = vpow.pop %v1685
        %v1687 = vmul.f32 %v1669, 1.442695
        %v1688 = vpow.pop %v1687
        %v1689 = vmul.f32 %v1670, 1.442695
        %v1690 = vpow.pop %v1689
        %v1691 = vmul.f32 %v1671, 1.442695
        %v1692 = vpow.pop %v1691
        %v1693 = vmul.f32 %v1672, 1.442695
        %v1694 = vpow.pop %v1693
        %v1695 = vmul.f32 %v1673, 1.442695
        %v1696 = vpow.pop %v1695
        %v1697 = vmul.f32 %v1674, 1.442695
        %v1698 = vpow.pop %v1697
        %v1699 = vmul.f32 %v1675, 1.442695
        %v1700 = vpow.pop %v1699
        %v1701 = vmul.f32 %v1676, 1.442695
        %v1702 = vpow.pop %v1701
        %v1703 = vmul.f32 %v1677, 1.442695
        %v1704 = vpow.pop %v1703
        %v1705 = vmul.f32 %v1678, 1.442695
        %v1706 = vpow.pop %v1705
        %v1707 = vmul.f32 %v1679, 1.442695
        %v1708 = vpow.pop %v1707
        %v1709 = vmul.f32 %v1680, 1.442695
        %v1710 = vpow.pop %v1709
        %v1711 = vmul.f32 %v1681, 1.442695
        %v1712 = vpow.pop %v1711
        %v1713 = vmul.f32 %v1682, 1.442695
        %v1714 = vpow.pop %v1713
        %1715 = vadd.xlane.f32.xlu0 %v1684
        %v1716 = vpop.xlane.xlu0 %1715
        %1717 = vadd.xlane.f32.xlu0 %v1686
        %v1718 = vpop.xlane.xlu0 %1717
        %1719 = vadd.xlane.f32.xlu0 %v1688
        %v1720 = vpop.xlane.xlu0 %1719
        %1721 = vadd.xlane.f32.xlu0 %v1690
        %v1722 = vpop.xlane.xlu0 %1721
        %1723 = vadd.xlane.f32.xlu0 %v1692
        %v1724 = vpop.xlane.xlu0 %1723
        %1725 = vadd.xlane.f32.xlu0 %v1694
        %v1726 = vpop.xlane.xlu0 %1725
        %1727 = vadd.xlane.f32.xlu0 %v1696
        %v1728 = vpop.xlane.xlu0 %1727
        %1729 = vadd.xlane.f32.xlu0 %v1698
        %v1730 = vpop.xlane.xlu0 %1729
        %1731 = vadd.xlane.f32.xlu0 %v1700
        %v1732 = vpop.xlane.xlu0 %1731
        %1733 = vadd.xlane.f32.xlu0 %v1702
        %v1734 = vpop.xlane.xlu0 %1733
        %1735 = vadd.xlane.f32.xlu0 %v1704
        %v1736 = vpop.xlane.xlu0 %1735
        %1737 = vadd.xlane.f32.xlu0 %v1706
        %v1738 = vpop.xlane.xlu0 %1737
        %1739 = vadd.xlane.f32.xlu0 %v1708
        %v1740 = vpop.xlane.xlu0 %1739
        %1741 = vadd.xlane.f32.xlu0 %v1710
        %v1742 = vpop.xlane.xlu0 %1741
        %1743 = vadd.xlane.f32.xlu0 %v1712
        %v1744 = vpop.xlane.xlu0 %1743
        %1745 = vadd.xlane.f32.xlu0 %v1714
        %v1746 = vpop.xlane.xlu0 %1745
        %v1747 = vrcp.pop %v1716
        %v1748 = vmul.f32 %v1684, %v1747
        %v1749 = vrcp.pop %v1718
        %v1750 = vmul.f32 %v1686, %v1749
        %v1751 = vrcp.pop %v1720
        %v1752 = vmul.f32 %v1688, %v1751
        %v1753 = vrcp.pop %v1722
        %v1754 = vmul.f32 %v1690, %v1753
        %v1755 = vrcp.pop %v1724
        %v1756 = vmul.f32 %v1692, %v1755
        %v1757 = vrcp.pop %v1726
        %v1758 = vmul.f32 %v1694, %v1757
        %v1759 = vrcp.pop %v1728
        %v1760 = vmul.f32 %v1696, %v1759
        %v1761 = vrcp.pop %v1730
        %v1762 = vmul.f32 %v1698, %v1761
        %v1763 = vrcp.pop %v1732
        %v1764 = vmul.f32 %v1700, %v1763
        %v1765 = vrcp.pop %v1734
        %v1766 = vmul.f32 %v1702, %v1765
        %v1767 = vrcp.pop %v1736
        %v1768 = vmul.f32 %v1704, %v1767
        %v1769 = vrcp.pop %v1738
        %v1770 = vmul.f32 %v1706, %v1769
        %v1771 = vrcp.pop %v1740
        %v1772 = vmul.f32 %v1708, %v1771
        %v1773 = vrcp.pop %v1742
        %v1774 = vmul.f32 %v1710, %v1773
        %v1775 = vrcp.pop %v1744
        %v1776 = vmul.f32 %v1712, %v1775
        %v1777 = vrcp.pop %v1746
        %v1778 = vmul.f32 %v1714, %v1777
        %1795 = vrot.lane.b32.xlu0 %v1314, 64
        %v1796 = vpop.permute.xlu0 %1795
        %1797 = vrot.lane.b32.xlu0 %v1315, 64
        %v1798 = vpop.permute.xlu0 %1797
        %1799 = vrot.lane.b32.xlu0 %v1316, 64
        %v1800 = vpop.permute.xlu0 %1799
        %1801 = vrot.lane.b32.xlu0 %v1317, 64
        %v1802 = vpop.permute.xlu0 %1801
        %1803 = vrot.lane.b32.xlu0 %v1318, 64
        %v1804 = vpop.permute.xlu0 %1803
        %1805 = vrot.lane.b32.xlu0 %v1319, 64
        %v1806 = vpop.permute.xlu0 %1805
        %1807 = vrot.lane.b32.xlu0 %v1320, 64
        %v1808 = vpop.permute.xlu0 %1807
        %1809 = vrot.lane.b32.xlu0 %v1321, 64
        %v1810 = vpop.permute.xlu0 %1809
        %1811 = vrot.lane.b32.xlu0 %v1322, 64
        %v1812 = vpop.permute.xlu0 %1811
        %1813 = vrot.lane.b32.xlu0 %v1323, 64
        %v1814 = vpop.permute.xlu0 %1813
        %1815 = vrot.lane.b32.xlu0 %v1324, 64
        %v1816 = vpop.permute.xlu0 %1815
        %1817 = vrot.lane.b32.xlu0 %v1325, 64
        %v1818 = vpop.permute.xlu0 %1817
        %1819 = vrot.lane.b32.xlu0 %v1326, 64
        %v1820 = vpop.permute.xlu0 %1819
        %1821 = vrot.lane.b32.xlu0 %v1327, 64
        %v1822 = vpop.permute.xlu0 %1821
        %1823 = vrot.lane.b32.xlu0 %v1328, 64
        %v1824 = vpop.permute.xlu0 %1823
        %1825 = vrot.lane.b32.xlu0 %v1329, 64
        %v1826 = vpop.permute.xlu0 %1825
        %1843 = vmatprep.subr.mxu0 0.0
        %1844 = vmatpush1.msra.mxu0 %v1826
        %1845 = vmatprep.subr.mxu0 0.0
        %1846 = vmatpush1.msra.mxu0 %v1824
        %1847 = vmatprep.subr.mxu0 0.0
        %1848 = vmatpush1.msra.mxu0 %v1822
        %1849 = vmatprep.subr.mxu0 0.0
        %1850 = vmatpush1.msra.mxu0 %v1820
        %1851 = vmatprep.subr.mxu0 0.0
        %1852 = vmatpush1.msra.mxu0 %v1818
        %1853 = vmatprep.subr.mxu0 0.0
        %1854 = vmatpush1.msra.mxu0 %v1816
        %1855 = vmatprep.subr.mxu0 0.0
        %1856 = vmatpush1.msra.mxu0 %v1814
        %1857 = vmatprep.subr.mxu0 0.0
        %1858 = vmatpush1.msra.mxu0 %v1812
        %1859 = vmatprep.subr.mxu0 0.0
        %1860 = vmatpush1.msra.mxu0 %v1810
        %1861 = vmatprep.subr.mxu0 0.0
        %1862 = vmatpush1.msra.mxu0 %v1808
        %1863 = vmatprep.subr.mxu0 0.0
        %1864 = vmatpush1.msra.mxu0 %v1806
        %1865 = vmatprep.subr.mxu0 0.0
        %1866 = vmatpush1.msra.mxu0 %v1804
        %1867 = vmatprep.subr.mxu0 0.0
        %1868 = vmatpush1.msra.mxu0 %v1802
        %1869 = vmatprep.subr.mxu0 0.0
        %1870 = vmatpush1.msra.mxu0 %v1800
        %1871 = vmatprep.subr.mxu0 0.0
        %1872 = vmatpush1.msra.mxu0 %v1798
        %1873 = vmatprep.subr.mxu0 0.0
        %1874 = vmatpush1.msra.mxu0 %v1796
        %1875 = vmatprep.subr.mxu0 0.0
        %1876 = vmatpush2.msra.mxu0 0.0
        %1877 = vmatprep.subr.mxu0 0.0
        %1878 = vmatpush2.msra.mxu0 0.0
        %1879 = vmatprep.subr.mxu0 0.0
        %1880 = vmatpush2.msra.mxu0 0.0
        %1881 = vmatprep.subr.mxu0 0.0
        %1882 = vmatpush2.msra.mxu0 0.0
        %1883 = vmatprep.subr.mxu0 0.0
        %1884 = vmatpush2.msra.mxu0 0.0
        %1885 = vmatprep.subr.mxu0 0.0
        %1886 = vmatpush2.msra.mxu0 0.0
        %1887 = vmatprep.subr.mxu0 0.0
        %1888 = vmatpush2.msra.mxu0 0.0
        %1889 = vmatprep.subr.mxu0 0.0
        %1890 = vmatpush2.msra.mxu0 0.0
        %1891 = vmatprep.subr.mxu0 0.0
        %1892 = vmatpush2.msra.mxu0 0.0
        %1893 = vmatprep.subr.mxu0 0.0
        %1894 = vmatpush2.msra.mxu0 0.0
        %1895 = vmatprep.subr.mxu0 0.0
        %1896 = vmatpush2.msra.mxu0 0.0
        %1897 = vmatprep.subr.mxu0 0.0
        %1898 = vmatpush2.msra.mxu0 0.0
        %1899 = vmatprep.subr.mxu0 0.0
        %1900 = vmatpush2.msra.mxu0 0.0
        %1901 = vmatprep.subr.mxu0 0.0
        %1902 = vmatpush2.msra.mxu0 0.0
        %1903 = vmatprep.subr.mxu0 0.0
        %1904 = vmatpush2.msra.mxu0 0.0
        %1905 = vmatprep.subr.mxu0 0.0
        %1906 = vmatpush2.msra.mxu0 0.0
        %1907 = vmatprep.mubr.f32.mxu0 0.0
        %1908 = vmatmul.mubr.f32.gmra.mxu0 %v1748
        %v1909 = vpop.f32.mrf.mxu0
        %v1910 = vadd.f32 0.0, %v1909
        %v1911 = vpop.f32.mrf.mxu0
        %1912 = vmatprep.mubr.f32.mxu0 0.0
        %1913 = vmatmul.mubr.f32.gmra.mxu0 %v1750
        %v1914 = vpop.f32.mrf.mxu0
        %v1915 = vadd.f32 0.0, %v1914
        %v1916 = vpop.f32.mrf.mxu0
        %1917 = vmatprep.mubr.f32.mxu0 0.0
        %1918 = vmatmul.mubr.f32.gmra.mxu0 %v1752
        %v1919 = vpop.f32.mrf.mxu0
        %v1920 = vadd.f32 0.0, %v1919
        %v1921 = vpop.f32.mrf.mxu0
        %1922 = vmatprep.mubr.f32.mxu0 0.0
        %1923 = vmatmul.mubr.f32.gmra.mxu0 %v1754
        %v1924 = vpop.f32.mrf.mxu0
        %v1925 = vadd.f32 0.0, %v1924
        %v1926 = vpop.f32.mrf.mxu0
        %1927 = vmatprep.mubr.f32.mxu0 0.0
        %1928 = vmatmul.mubr.f32.gmra.mxu0 %v1756
        %v1929 = vpop.f32.mrf.mxu0
        %v1930 = vadd.f32 0.0, %v1929
        %v1931 = vpop.f32.mrf.mxu0
        %1932 = vmatprep.mubr.f32.mxu0 0.0
        %1933 = vmatmul.mubr.f32.gmra.mxu0 %v1758
        %v1934 = vpop.f32.mrf.mxu0
        %v1935 = vadd.f32 0.0, %v1934
        %v1936 = vpop.f32.mrf.mxu0
        %1937 = vmatprep.mubr.f32.mxu0 0.0
        %1938 = vmatmul.mubr.f32.gmra.mxu0 %v1760
        %v1939 = vpop.f32.mrf.mxu0
        %v1940 = vadd.f32 0.0, %v1939
        %v1941 = vpop.f32.mrf.mxu0
        %1942 = vmatprep.mubr.f32.mxu0 0.0
        %1943 = vmatmul.mubr.f32.gmra.mxu0 %v1762
        %v1944 = vpop.f32.mrf.mxu0
        %v1945 = vadd.f32 0.0, %v1944
        %v1946 = vpop.f32.mrf.mxu0
        %1947 = vmatprep.mubr.f32.mxu0 0.0
        %1948 = vmatmul.mubr.f32.gmra.mxu0 %v1764
        %v1949 = vpop.f32.mrf.mxu0
        %v1950 = vadd.f32 0.0, %v1949
        %v1951 = vpop.f32.mrf.mxu0
        %1952 = vmatprep.mubr.f32.mxu0 0.0
        %1953 = vmatmul.mubr.f32.gmra.mxu0 %v1766
        %v1954 = vpop.f32.mrf.mxu0
        %v1955 = vadd.f32 0.0, %v1954
        %v1956 = vpop.f32.mrf.mxu0
        %1957 = vmatprep.mubr.f32.mxu0 0.0
        %1958 = vmatmul.mubr.f32.gmra.mxu0 %v1768
        %v1959 = vpop.f32.mrf.mxu0
        %v1960 = vadd.f32 0.0, %v1959
        %v1961 = vpop.f32.mrf.mxu0
        %1962 = vmatprep.mubr.f32.mxu0 0.0
        %1963 = vmatmul.mubr.f32.gmra.mxu0 %v1770
        %v1964 = vpop.f32.mrf.mxu0
        %v1965 = vadd.f32 0.0, %v1964
        %v1966 = vpop.f32.mrf.mxu0
        %1967 = vmatprep.mubr.f32.mxu0 0.0
        %1968 = vmatmul.mubr.f32.gmra.mxu0 %v1772
        %v1969 = vpop.f32.mrf.mxu0
        %v1970 = vadd.f32 0.0, %v1969
        %v1971 = vpop.f32.mrf.mxu0
        %1972 = vmatprep.mubr.f32.mxu0 0.0
        %1973 = vmatmul.mubr.f32.gmra.mxu0 %v1774
        %v1974 = vpop.f32.mrf.mxu0
        %v1975 = vadd.f32 0.0, %v1974
        %v1976 = vpop.f32.mrf.mxu0
        %1977 = vmatprep.mubr.f32.mxu0 0.0
        %1978 = vmatmul.mubr.f32.gmra.mxu0 %v1776
        %v1979 = vpop.f32.mrf.mxu0
        %v1980 = vadd.f32 0.0, %v1979
        %v1981 = vpop.f32.mrf.mxu0
        %1982 = vmatprep.mubr.f32.mxu0 0.0
        %1983 = vmatmul.mubr.f32.gmra.mxu0 %v1778
        %v1984 = vpop.f32.mrf.mxu0
        %v1985 = vadd.f32 0.0, %v1984
        %v1986 = vpop.f32.mrf.mxu0
        %1987 = vdwg.mxu0
        %2004 = vrot.lane.b32.xlu0 %v1910, 64
        %v2005 = vpop.permute.xlu0 %2004
        %2006 = vrot.lane.b32.xlu0 %v1915, 64
        %v2007 = vpop.permute.xlu0 %2006
        %2008 = vrot.lane.b32.xlu0 %v1920, 64
        %v2009 = vpop.permute.xlu0 %2008
        %2010 = vrot.lane.b32.xlu0 %v1925, 64
        %v2011 = vpop.permute.xlu0 %2010
        %2012 = vrot.lane.b32.xlu0 %v1930, 64
        %v2013 = vpop.permute.xlu0 %2012
        %2014 = vrot.lane.b32.xlu0 %v1935, 64
        %v2015 = vpop.permute.xlu0 %2014
        %2016 = vrot.lane.b32.xlu0 %v1940, 64
        %v2017 = vpop.permute.xlu0 %2016
        %2018 = vrot.lane.b32.xlu0 %v1945, 64
        %v2019 = vpop.permute.xlu0 %2018
        %2020 = vrot.lane.b32.xlu0 %v1950, 64
        %v2021 = vpop.permute.xlu0 %2020
        %2022 = vrot.lane.b32.xlu0 %v1955, 64
        %v2023 = vpop.permute.xlu0 %2022
        %2024 = vrot.lane.b32.xlu0 %v1960, 64
        %v2025 = vpop.permute.xlu0 %2024
        %2026 = vrot.lane.b32.xlu0 %v1965, 64
        %v2027 = vpop.permute.xlu0 %2026
        %2028 = vrot.lane.b32.xlu0 %v1970, 64
        %v2029 = vpop.permute.xlu0 %2028
        %2030 = vrot.lane.b32.xlu0 %v1975, 64
        %v2031 = vpop.permute.xlu0 %2030
        %2032 = vrot.lane.b32.xlu0 %v1980, 64
        %v2033 = vpop.permute.xlu0 %2032
        %2034 = vrot.lane.b32.xlu0 %v1985, 64
        %v2035 = vpop.permute.xlu0 %2034
        %vm2052 = vcmask 1048064
        %2053 = vst.msk [vmem:[#allocation5] sm:$0xff] %vm2052, %v2005
        %2054 = vst.msk [vmem:[#allocation5 + $0x8] sm:$0xff] %vm2052, %v2007
        %2055 = vst.msk [vmem:[#allocation5 + $0x10] sm:$0xff] %vm2052, %v2009
        %2056 = vst.msk [vmem:[#allocation5 + $0x18] sm:$0xff] %vm2052, %v2011
        %2057 = vst.msk [vmem:[#allocation5 + $0x20] sm:$0xff] %vm2052, %v2013
        %2058 = vst.msk [vmem:[#allocation5 + $0x28] sm:$0xff] %vm2052, %v2015
        %2059 = vst.msk [vmem:[#allocation5 + $0x30] sm:$0xff] %vm2052, %v2017
        %2060 = vst.msk [vmem:[#allocation5 + $0x38] sm:$0xff] %vm2052, %v2019
        %2061 = vst.msk [vmem:[#allocation5 + $0x40] sm:$0xff] %vm2052, %v2021
        %2062 = vst.msk [vmem:[#allocation5 + $0x48] sm:$0xff] %vm2052, %v2023
        %2063 = vst.msk [vmem:[#allocation5 + $0x50] sm:$0xff] %vm2052, %v2025
        %2064 = vst.msk [vmem:[#allocation5 + $0x58] sm:$0xff] %vm2052, %v2027
        %2065 = vst.msk [vmem:[#allocation5 + $0x60] sm:$0xff] %vm2052, %v2029
        %2066 = vst.msk [vmem:[#allocation5 + $0x68] sm:$0xff] %vm2052, %v2031
        %2067 = vst.msk [vmem:[#allocation5 + $0x70] sm:$0xff] %vm2052, %v2033
        %2068 = vst.msk [vmem:[#allocation5 + $0x78] sm:$0xff] %vm2052, %v2035
        %v2069 = vld [vmem:[#allocation5] sm:$0xff]
        %v2070 = vld [vmem:[#allocation5 + $0x8] sm:$0xff]
        %v2071 = vld [vmem:[#allocation5 + $0x10] sm:$0xff]
        %v2072 = vld [vmem:[#allocation5 + $0x18] sm:$0xff]
        %v2073 = vld [vmem:[#allocation5 + $0x20] sm:$0xff]
        %v2074 = vld [vmem:[#allocation5 + $0x28] sm:$0xff]
        %v2075 = vld [vmem:[#allocation5 + $0x30] sm:$0xff]
        %v2076 = vld [vmem:[#allocation5 + $0x38] sm:$0xff]
        %v2077 = vld [vmem:[#allocation5 + $0x40] sm:$0xff]
        %v2078 = vld [vmem:[#allocation5 + $0x48] sm:$0xff]
        %v2079 = vld [vmem:[#allocation5 + $0x50] sm:$0xff]
        %v2080 = vld [vmem:[#allocation5 + $0x58] sm:$0xff]
        %v2081 = vld [vmem:[#allocation5 + $0x60] sm:$0xff]
        %v2082 = vld [vmem:[#allocation5 + $0x68] sm:$0xff]
        %v2083 = vld [vmem:[#allocation5 + $0x70] sm:$0xff]
        %v2084 = vld [vmem:[#allocation5 + $0x78] sm:$0xff]
        %v2085 = vld [vmem:[#allocation11] sm:$0xff]
        %v2086 = vld [vmem:[#allocation11 + $0x8] sm:$0xff]
        %v2087 = vld [vmem:[#allocation11 + $0x10] sm:$0xff]
        %v2088 = vld [vmem:[#allocation11 + $0x18] sm:$0xff]
        %v2089 = vld [vmem:[#allocation11 + $0x20] sm:$0xff]
        %v2090 = vld [vmem:[#allocation11 + $0x28] sm:$0xff]
        %v2091 = vld [vmem:[#allocation11 + $0x30] sm:$0xff]
        %v2092 = vld [vmem:[#allocation11 + $0x38] sm:$0xff]
        %v2093 = vld [vmem:[#allocation11 + $0x40] sm:$0xff]
        %v2094 = vld [vmem:[#allocation11 + $0x48] sm:$0xff]
        %v2095 = vld [vmem:[#allocation11 + $0x50] sm:$0xff]
        %v2096 = vld [vmem:[#allocation11 + $0x58] sm:$0xff]
        %v2097 = vld [vmem:[#allocation11 + $0x60] sm:$0xff]
        %v2098 = vld [vmem:[#allocation11 + $0x68] sm:$0xff]
        %v2099 = vld [vmem:[#allocation11 + $0x70] sm:$0xff]
        %v2100 = vld [vmem:[#allocation11 + $0x78] sm:$0xff]
        %v2101 = vld [vmem:[%s3] sm:$0x1]
        %v2103 = vlaneseq
        %v2104 = vshrl.u32 %v2103, 7
        %v2105 = vsub.s32 0, %v2104
        %v2106 = vrot.slane %v2101, %v2105
        %2108 = vmatprep.subr.mxu0 0.0
        %2109 = vmatpush1.msra.mxu0 %v2100
        %2110 = vmatprep.subr.mxu0 0.0
        %2111 = vmatpush1.msra.mxu0 %v2099
        %2112 = vmatprep.subr.mxu0 0.0
        %2113 = vmatpush1.msra.mxu0 %v2098
        %2114 = vmatprep.subr.mxu0 0.0
        %2115 = vmatpush1.msra.mxu0 %v2097
        %2116 = vmatprep.subr.mxu0 0.0
        %2117 = vmatpush1.msra.mxu0 %v2096
        %2118 = vmatprep.subr.mxu0 0.0
        %2119 = vmatpush1.msra.mxu0 %v2095
        %2120 = vmatprep.subr.mxu0 0.0
        %2121 = vmatpush1.msra.mxu0 %v2094
        %2122 = vmatprep.subr.mxu0 0.0
        %2123 = vmatpush1.msra.mxu0 %v2093
        %2124 = vmatprep.subr.mxu0 0.0
        %2125 = vmatpush1.msra.mxu0 %v2092
        %2126 = vmatprep.subr.mxu0 0.0
        %2127 = vmatpush1.msra.mxu0 %v2091
        %2128 = vmatprep.subr.mxu0 0.0
        %2129 = vmatpush1.msra.mxu0 %v2090
        %2130 = vmatprep.subr.mxu0 0.0
        %2131 = vmatpush1.msra.mxu0 %v2089
        %2132 = vmatprep.subr.mxu0 0.0
        %2133 = vmatpush1.msra.mxu0 %v2088
        %2134 = vmatprep.subr.mxu0 0.0
        %2135 = vmatpush1.msra.mxu0 %v2087
        %2136 = vmatprep.subr.mxu0 0.0
        %2137 = vmatpush1.msra.mxu0 %v2086
        %2138 = vmatprep.subr.mxu0 0.0
        %2139 = vmatpush1.msra.mxu0 %v2085
        %2140 = vmatprep.subr.mxu0 0.0
        %2141 = vmatpush2.msra.mxu0 0.0
        %2142 = vmatprep.subr.mxu0 0.0
        %2143 = vmatpush2.msra.mxu0 0.0
        %2144 = vmatprep.subr.mxu0 0.0
        %2145 = vmatpush2.msra.mxu0 0.0
        %2146 = vmatprep.subr.mxu0 0.0
        %2147 = vmatpush2.msra.mxu0 0.0
        %2148 = vmatprep.subr.mxu0 0.0
        %2149 = vmatpush2.msra.mxu0 0.0
        %2150 = vmatprep.subr.mxu0 0.0
        %2151 = vmatpush2.msra.mxu0 0.0
        %2152 = vmatprep.subr.mxu0 0.0
        %2153 = vmatpush2.msra.mxu0 0.0
        %2154 = vmatprep.subr.mxu0 0.0
        %2155 = vmatpush2.msra.mxu0 0.0
        %2156 = vmatprep.subr.mxu0 0.0
        %2157 = vmatpush2.msra.mxu0 0.0
        %2158 = vmatprep.subr.mxu0 0.0
        %2159 = vmatpush2.msra.mxu0 0.0
        %2160 = vmatprep.subr.mxu0 0.0
        %2161 = vmatpush2.msra.mxu0 0.0
        %2162 = vmatprep.subr.mxu0 0.0
        %2163 = vmatpush2.msra.mxu0 0.0
        %2164 = vmatprep.subr.mxu0 0.0
        %2165 = vmatpush2.msra.mxu0 0.0
        %2166 = vmatprep.subr.mxu0 0.0
        %2167 = vmatpush2.msra.mxu0 0.0
        %2168 = vmatprep.subr.mxu0 0.0
        %2169 = vmatpush2.msra.mxu0 0.0
        %2170 = vmatprep.subr.mxu0 0.0
        %2171 = vmatpush2.msra.mxu0 0.0
        %2172 = vmatprep.mubr.f32.mxu0 0.0
        %2173 = vmatmul.mubr.f32.gmra.mxu0 %v2069
        %v2174 = vpop.f32.mrf.mxu0
        %v2175 = vadd.f32 %v2106, %v2174
        %v2176 = vpop.f32.mrf.mxu0
        %2177 = vmatprep.mubr.f32.mxu0 0.0
        %2178 = vmatmul.mubr.f32.gmra.mxu0 %v2070
        %v2179 = vpop.f32.mrf.mxu0
        %v2180 = vadd.f32 %v2106, %v2179
        %v2181 = vpop.f32.mrf.mxu0
        %2182 = vmatprep.mubr.f32.mxu0 0.0
        %2183 = vmatmul.mubr.f32.gmra.mxu0 %v2071
        %v2184 = vpop.f32.mrf.mxu0
        %v2185 = vadd.f32 %v2106, %v2184
        %v2186 = vpop.f32.mrf.mxu0
        %2187 = vmatprep.mubr.f32.mxu0 0.0
        %2188 = vmatmul.mubr.f32.gmra.mxu0 %v2072
        %v2189 = vpop.f32.mrf.mxu0
        %v2190 = vadd.f32 %v2106, %v2189
        %v2191 = vpop.f32.mrf.mxu0
        %2192 = vmatprep.mubr.f32.mxu0 0.0
        %2193 = vmatmul.mubr.f32.gmra.mxu0 %v2073
        %v2194 = vpop.f32.mrf.mxu0
        %v2195 = vadd.f32 %v2106, %v2194
        %v2196 = vpop.f32.mrf.mxu0
        %2197 = vmatprep.mubr.f32.mxu0 0.0
        %2198 = vmatmul.mubr.f32.gmra.mxu0 %v2074
        %v2199 = vpop.f32.mrf.mxu0
        %v2200 = vadd.f32 %v2106, %v2199
        %v2201 = vpop.f32.mrf.mxu0
        %2202 = vmatprep.mubr.f32.mxu0 0.0
        %2203 = vmatmul.mubr.f32.gmra.mxu0 %v2075
        %v2204 = vpop.f32.mrf.mxu0
        %v2205 = vadd.f32 %v2106, %v2204
        %v2206 = vpop.f32.mrf.mxu0
        %2207 = vmatprep.mubr.f32.mxu0 0.0
        %2208 = vmatmul.mubr.f32.gmra.mxu0 %v2076
        %v2209 = vpop.f32.mrf.mxu0
        %v2210 = vadd.f32 %v2106, %v2209
        %v2211 = vpop.f32.mrf.mxu0
        %2212 = vmatprep.mubr.f32.mxu0 0.0
        %2213 = vmatmul.mubr.f32.gmra.mxu0 %v2077
        %v2214 = vpop.f32.mrf.mxu0
        %v2215 = vadd.f32 %v2106, %v2214
        %v2216 = vpop.f32.mrf.mxu0
        %2217 = vmatprep.mubr.f32.mxu0 0.0
        %2218 = vmatmul.mubr.f32.gmra.mxu0 %v2078
        %v2219 = vpop.f32.mrf.mxu0
        %v2220 = vadd.f32 %v2106, %v2219
        %v2221 = vpop.f32.mrf.mxu0
        %2222 = vmatprep.mubr.f32.mxu0 0.0
        %2223 = vmatmul.mubr.f32.gmra.mxu0 %v2079
        %v2224 = vpop.f32.mrf.mxu0
        %v2225 = vadd.f32 %v2106, %v2224
        %v2226 = vpop.f32.mrf.mxu0
        %2227 = vmatprep.mubr.f32.mxu0 0.0
        %2228 = vmatmul.mubr.f32.gmra.mxu0 %v2080
        %v2229 = vpop.f32.mrf.mxu0
        %v2230 = vadd.f32 %v2106, %v2229
        %v2231 = vpop.f32.mrf.mxu0
        %2232 = vmatprep.mubr.f32.mxu0 0.0
        %2233 = vmatmul.mubr.f32.gmra.mxu0 %v2081
        %v2234 = vpop.f32.mrf.mxu0
        %v2235 = vadd.f32 %v2106, %v2234
        %v2236 = vpop.f32.mrf.mxu0
        %2237 = vmatprep.mubr.f32.mxu0 0.0
        %2238 = vmatmul.mubr.f32.gmra.mxu0 %v2082
        %v2239 = vpop.f32.mrf.mxu0
        %v2240 = vadd.f32 %v2106, %v2239
        %v2241 = vpop.f32.mrf.mxu0
        %2242 = vmatprep.mubr.f32.mxu0 0.0
        %2243 = vmatmul.mubr.f32.gmra.mxu0 %v2083
        %v2244 = vpop.f32.mrf.mxu0
        %v2245 = vadd.f32 %v2106, %v2244
        %v2246 = vpop.f32.mrf.mxu0
        %2247 = vmatprep.mubr.f32.mxu0 0.0
        %2248 = vmatmul.mubr.f32.gmra.mxu0 %v2084
        %v2249 = vpop.f32.mrf.mxu0
        %v2250 = vadd.f32 %v2106, %v2249
        %v2251 = vpop.f32.mrf.mxu0
        %2252 = vdwg.mxu0
        %2253 = vst [vmem:[%s258] sm:$0xff] %v2175
        %2254 = vst [vmem:[%s258 + $0x8] sm:$0xff] %v2180
        %2255 = vst [vmem:[%s258 + $0x10] sm:$0xff] %v2185
        %2256 = vst [vmem:[%s258 + $0x18] sm:$0xff] %v2190
        %2257 = vst [vmem:[%s258 + $0x20] sm:$0xff] %v2195
        %2258 = vst [vmem:[%s258 + $0x28] sm:$0xff] %v2200
        %2259 = vst [vmem:[%s258 + $0x30] sm:$0xff] %v2205
        %2260 = vst [vmem:[%s258 + $0x38] sm:$0xff] %v2210
        %2261 = vst [vmem:[%s258 + $0x40] sm:$0xff] %v2215
        %2262 = vst [vmem:[%s258 + $0x48] sm:$0xff] %v2220
        %2263 = vst [vmem:[%s258 + $0x50] sm:$0xff] %v2225
        %2264 = vst [vmem:[%s258 + $0x58] sm:$0xff] %v2230
        %2265 = vst [vmem:[%s258 + $0x60] sm:$0xff] %v2235
        %2266 = vst [vmem:[%s258 + $0x68] sm:$0xff] %v2240
        %2267 = vst [vmem:[%s258 + $0x70] sm:$0xff] %v2245
        %2268 = vst [vmem:[%s258 + $0x78] sm:$0xff] %v2250
        %s2269 = sand.u32 %s133, 1
        %s2270 = scalar_lea.sflag [#allocation8], %s2269
        %s2271 = sand.u32 %s133, 1
        %s2272 = smul.addr %s2271, 128
        %s2273 = scalar_lea.vmem [#allocation12], %s2272
        // Predicated region
        $region53: #{tpu_custom_call.1} parent=35 // pred_check
          %p2274 = pneg %p143
        $region54: #{tpu_custom_call.1} parent=35 // pred_check_branch
          %2276 = sbr.rel (%p2274) target = $region56
        $region55: #{tpu_custom_call.1} parent=35 // pred_region
          %s2277 = smul.u32 16, %s27
          %s2279 = ssub.s32 2048, 2048
          %2280 = vsyncadd %s2270, %s2279
          %s2281 = smul.addr %s26, 16
          %s2282 = sadd.s32 %s2277, %s2281
          %s2283 = smul.addr %s2282, 128
          %s2284 = scalar_lea.hbm %s4, %s2283
          %s2285 = sshll.u32 %s2273, 4
          %s2286 = int_to_ptr.vmem [resolvable:$true] %s2285
          %2291 = dma.vmem_to_hbm [thread:$0]  %s2286, 2048, %s2284, %s2270, 128, 128, 8
        $region56: #{tpu_custom_call.1} parent=35 // pred_fallthru
          _
      $region36: #{tpu_custom_call.1} parent=5 // pred_fallthru
        _
      %p2292 = scmp.le.s32.totalorder 2, %s17
      // Predicated region
      $region57: #{tpu_custom_call.1} parent=5 // pred_check
        %p2293 = pneg %p2292
      $region58: #{tpu_custom_call.1} parent=5 // pred_check_branch
        %2295 = sbr.rel (%p2293) target = $region60
      $region59: #{tpu_custom_call.1} parent=5 // pred_region
        %s2296 = ssub.s32 %s17, 2
        // Predicated region
        $region61: #{tpu_custom_call.1} parent=59 // pred_check
          %p2297 = pneg %p149
        $region62: #{tpu_custom_call.1} parent=59 // pred_check_branch
          %2299 = sbr.rel (%p2297) target = $region64
        $region63: #{tpu_custom_call.1} parent=59 // pred_region
          %s2300 = sand.u32 %s134, 1
          %s2301 = scalar_lea.sflag [#allocation8], %s2300
          %s2302 = sand.u32 %s134, 1
          %s2303 = smul.addr %s2302, 128
          %s2304 = scalar_lea.vmem [#allocation12], %s2303
          %2305 = dma.done %s2301, 2048
        $region64: #{tpu_custom_call.1} parent=59 // pred_fallthru
          _
      $region60: #{tpu_custom_call.1} parent=5 // pred_fallthru
        _
    $region6: #{tpu_custom_call.1} parent=1 // loop_footer
      %s21 = sadd.s32 1, %s17
    $region7: #{tpu_custom_call.1} parent=1 // loop_footer_branch
      %16 = sbr.rel target = $region3
    $region8: #{tpu_custom_call.1} parent=1 // loop_exit
      _
    %2306 = vsyncpa [#allocation7], 1
    %s2307 = scalar_lea.sflag [#allocation7], 1
    %2308 = vsyncpa %s2307, 1
    %2309 = vsyncpa [#allocation10], 1
    %2310 = vsyncpa [#allocation8], 1
    %s2311 = scalar_lea.sflag [#allocation8], 1
    %2312 = vsyncpa %s2311, 1

</llo_original>
